<compile_context>
chip_gen: v7x
topology: tpu7x:2x2x1
jax: 0.10.0
libtpu: 0.0.40
codegen_flags: <defaults>
</compile_context>

<pallas_src>
import math

import numpy as np
import jax
import jax.numpy as jnp
from jax.experimental import pallas as pl
from jax.experimental.pallas import tpu as pltpu


_COMPILER_PARAMS = pltpu.CompilerParams(
    dimension_semantics=("parallel",),
    vmem_limit_bytes=32 * 1024 * 1024,
)


def _round_up(x, m):
    return -(-x // m) * m


def _pick_m_tile(M, per_img):
    """Column-tile: multiple of both the per-image column count (so in-block
    lane-rolls never cross an image boundary for valid outputs) and 128
    (lane-dense stores); aim for >=2 grid steps (v7x megacore), cap ~1024."""
    unit = per_img * (128 // math.gcd(per_img, 128))   # lcm(per_img, 128)
    if M <= unit:
        return M
    tile = _round_up(-(-M // 2), unit)
    cap = max(unit, (1024 // unit) * unit)
    return max(unit, min(tile, cap))


def _pick_n_tile(N):
    if N <= 8:
        return N
    return min(256, _round_up(-(-N // 2), 8))


# ----------------------------------------------------------------------------
# Fused conv + bias + ReLU + 2x2 max-pool (in-kernel im2col over 9 lane shifts)
# ----------------------------------------------------------------------------
def _make_conv_kernel(oc_pad, rows, shifts):
    def kernel(x_ref, w_ref, b_ref, o_ref, col_ref):
        # x_ref: (rows, mt) pool-phase de-interleaved input, rows = C*4 (c,u,v)
        # w_ref: (4*oc_pad, 9*rows) pool-phase/shift-folded weights
        # b_ref: (oc_pad, 1) bias column
        # o_ref: (oc_pad, mt) pooled output (lane = flattened (n, a, b) grid)
        # col_ref: VMEM scratch (9*rows, mt) -- in-kernel im2col
        x = x_ref[...]
        mt = x.shape[-1]
        # Manual lane-roll per shift; the wrap-around tail only lands on output
        # columns that are outside the valid pooled region (blocks are image-
        # aligned), so it never pollutes kept values.
        for s, sh in enumerate(shifts):
            v = x if sh == 0 else jnp.concatenate([x[:, sh:], x[:, :sh]], axis=1)
            col_ref[s * rows:(s + 1) * rows, :] = v
        # One GEMM: (4 pool phases * OC, 9*rows) x (9*rows, mt).
        acc = jnp.dot(w_ref[...], col_ref[...],
                      preferred_element_type=jnp.float32)
        # Max over the 4 pool phases (commutes with the monotone bias + ReLU).
        m = jnp.maximum(
            jnp.maximum(acc[0 * oc_pad:1 * oc_pad], acc[1 * oc_pad:2 * oc_pad]),
            jnp.maximum(acc[2 * oc_pad:3 * oc_pad], acc[3 * oc_pad:4 * oc_pad]))
        o_ref[...] = jnp.maximum(m + b_ref[...], 0.0)
    return kernel


def conv_relu_pool(xr, w_full, b_col, *, per_img, bg):
    """xr: (rows, M) de-interleaved activation, M = N*per_img (multiple of 128).
    w_full: (4*OC_pad, 9*rows) folded weights.  b_col: (OC_pad, 1).
    Returns (OC_pad, M) pooled activation on the (n, a, b) lane grid."""
    rows, M = xr.shape
    oc_pad = b_col.shape[0]
    assert w_full.shape == (4 * oc_pad, 9 * rows)
    m_tile = _pick_m_tile(M, per_img)
    shifts = tuple(qi * bg + qj for qi in range(3) for qj in range(3))

    return pl.pallas_call(
        _make_conv_kernel(oc_pad, rows, shifts),
        out_shape=jax.ShapeDtypeStruct((oc_pad, M), jnp.float32),
        grid=(pl.cdiv(M, m_tile),),
        in_specs=[
            pl.BlockSpec((rows, m_tile), lambda i: (0, i)),
            pl.BlockSpec((4 * oc_pad, 9 * rows), lambda i: (0, 0)),
            pl.BlockSpec((oc_pad, 1), lambda i: (0, 0)),
        ],
        out_specs=pl.BlockSpec((oc_pad, m_tile), lambda i: (0, i)),
        scratch_shapes=[pltpu.VMEM((9 * rows, m_tile), jnp.float32)],
        compiler_params=_COMPILER_PARAMS,
        cost_estimate=pl.CostEstimate(
            flops=2 * 4 * oc_pad * 9 * rows * M,
            transcendentals=0,
            bytes_accessed=4 * (rows * M + 4 * oc_pad * 9 * rows
                                + oc_pad + oc_pad * M)),
    )(xr, w_full, b_col)


# ----------------------------------------------------------------------------
# Fused 3-layer MLP head (one pallas_call, weights resident in VMEM)
# ----------------------------------------------------------------------------
def _mlp3_kernel(x_ref, w1_ref, b1_ref, w2_ref, b2_ref, w3_ref, b3_ref, o_ref):
    h = jnp.dot(x_ref[...], w1_ref[...], preferred_element_type=jnp.float32)
    h = jnp.maximum(h + b1_ref[...], 0.0)
    h = jnp.dot(h, w2_ref[...], preferred_element_type=jnp.float32)
    h = jnp.maximum(h + b2_ref[...], 0.0)
    o_ref[...] = (jnp.dot(h, w3_ref[...], preferred_element_type=jnp.float32)
                  + b3_ref[...])


def fc_fused(x_pad, fw1, fb1, fw2, fb2, fw3, fb3):
    N, K1 = x_pad.shape
    H1, H2, H3 = fw1.shape[1], fw2.shape[1], fw3.shape[1]
    n_tile = _pick_n_tile(N)

    return pl.pallas_call(
        _mlp3_kernel,
        out_shape=jax.ShapeDtypeStruct((N, H3), jnp.float32),
        grid=(pl.cdiv(N, n_tile),),
        in_specs=[
            pl.BlockSpec((n_tile, K1), lambda i: (i, 0)),
            pl.BlockSpec((K1, H1), lambda i: (0, 0)),
            pl.BlockSpec((1, H1), lambda i: (0, 0)),
            pl.BlockSpec((H1, H2), lambda i: (0, 0)),
            pl.BlockSpec((1, H2), lambda i: (0, 0)),
            pl.BlockSpec((H2, H3), lambda i: (0, 0)),
            pl.BlockSpec((1, H3), lambda i: (0, 0)),
        ],
        out_specs=pl.BlockSpec((n_tile, H3), lambda i: (i, 0)),
        compiler_params=_COMPILER_PARAMS,
        cost_estimate=pl.CostEstimate(
            flops=2 * N * (K1 * H1 + H1 * H2 + H2 * H3),
            transcendentals=0,
            bytes_accessed=4 * (N * K1 + K1 * H1 + H1 * H2 + H2 * H3
                                + H1 + H2 + H3 + N * H3)),
    )(x_pad, fw1, fb1, fw2, fb2, fw3, fb3)


# ----------------------------------------------------------------------------
# Parameters: PyTorch-layout init + one-time prep (fold / pad / transpose)
# ----------------------------------------------------------------------------
def init_params(key):
    ks = jax.random.split(key, 10)
    s = 0.1
    return {
        "conv1_w": s * jax.random.normal(ks[0], (6, 3, 5, 5), jnp.float32),
        "conv1_b": s * jax.random.normal(ks[1], (6,), jnp.float32),
        "conv2_w": s * jax.random.normal(ks[2], (16, 6, 5, 5), jnp.float32),
        "conv2_b": s * jax.random.normal(ks[3], (16,), jnp.float32),
        "fc1_w": s * jax.random.normal(ks[4], (120, 16 * 5 * 5), jnp.float32),
        "fc1_b": s * jax.random.normal(ks[5], (120,), jnp.float32),
        "fc2_w": s * jax.random.normal(ks[6], (84, 120), jnp.float32),
        "fc2_b": s * jax.random.normal(ks[7], (84,), jnp.float32),
        "fc3_w": s * jax.random.normal(ks[8], (25, 84), jnp.float32),
        "fc3_b": s * jax.random.normal(ks[9], (25,), jnp.float32),
    }


def _fold_conv_pool_weight(w, oc_pad, c_pad):
    """Fold a (OC, C, 5, 5) conv weight over (pool phase, shift) for the
    in-kernel im2col.  Rows of the de-interleaved input are r = c*4 + u*2 + v
    with input h = 2a+u, w = 2b+v.  For pool phase (di,dj) and tap (i,j):
    di+i = 2*qi+ui, dj+j = 2*qj+vj -> shift index s = qi*3+qj.
    Result shape: (4*oc_pad, 9*c_pad*4)."""
    w = np.asarray(w, np.float32)
    OC, C, KH, KW = w.shape
    rows = c_pad * 4
    wf = np.zeros((4 * oc_pad, 9, rows), np.float32)
    for di in range(2):
        for dj in range(2):
            p = di * 2 + dj
            for i in range(KH):
                for j in range(KW):
                    qi, ui = divmod(di + i, 2)
                    qj, vj = divmod(dj + j, 2)
                    s = qi * 3 + qj
                    for c in range(C):
                        r = c * 4 + ui * 2 + vj
                        wf[p * oc_pad:p * oc_pad + OC, s, r] = w[:, c, i, j]
    return jnp.asarray(wf.reshape(4 * oc_pad, 9 * rows))


def prepare_params(p):
    """One-time folding / padding / transposition of weights (no per-call .T)."""
    f32 = jnp.float32
    # conv1: OC 6 -> 8 (pad), input channels 3 -> 4 (pad) => rows 16, W (32,144)
    w1 = _fold_conv_pool_weight(p["conv1_w"], oc_pad=8, c_pad=4)
    b1 = jnp.pad(p["conv1_b"], (0, 2)).reshape(8, 1).astype(f32)
    # conv2: OC 16, input carries 8 channels (2 zero-padded) => rows 32, W (64,288)
    w2 = _fold_conv_pool_weight(p["conv2_w"], oc_pad=16, c_pad=8)
    b2 = p["conv2_b"].reshape(16, 1).astype(f32)
    # FC: PyTorch Linear computes x @ W.T + b -> pre-transpose, pad to 128s.
    fw1 = jnp.pad(p["fc1_w"].T, ((0, 512 - 400), (0, 128 - 120))).astype(f32)
    fb1 = jnp.pad(p["fc1_b"], (0, 128 - 120)).reshape(1, 128).astype(f32)
    fw2 = jnp.pad(p["fc2_w"].T, ((0, 128 - 120), (0, 128 - 84))).astype(f32)
    fb2 = jnp.pad(p["fc2_b"], (0, 128 - 84)).reshape(1, 128).astype(f32)
    fw3 = jnp.pad(p["fc3_w"].T, ((0, 128 - 84), (0, 128 - 25))).astype(f32)
    fb3 = jnp.pad(p["fc3_b"], (0, 128 - 25)).reshape(1, 128).astype(f32)
    return {"w1": w1, "b1": b1, "w2": w2, "b2": b2,
            "fw1": fw1, "fb1": fb1, "fw2": fw2, "fb2": fb2,
            "fw3": fw3, "fb3": fb3}


# ----------------------------------------------------------------------------
# Forward pass (3 pallas_calls; only tiny de-interleave/flatten glue between)
# ----------------------------------------------------------------------------
def net_forward(prep, x):
    # x: (N, 3, 32, 32) float32 NCHW (module only supports 32x32 images).
    N = x.shape[0]

    # --- conv1: de-interleave input by pool phase onto a 16x16 per-image grid.
    # rows = (c, u, v) with h = 2a+u, w = 2b+v; cols = (n, a, b), 256/image.
    xr1 = x.reshape(N, 3, 16, 2, 16, 2).transpose(1, 3, 5, 0, 2, 4)
    xr1 = jnp.pad(xr1, ((0, 1),) + ((0, 0),) * 5).reshape(16, N * 256)
    o1 = conv_relu_pool(xr1, prep["w1"], prep["b1"], per_img=256, bg=16)

    # --- conv2: keep only the valid 14x14 pooled grid, de-interleave again
    # onto an 8x16 per-image grid (128 cols/image, lane-dense at any batch).
    a1 = o1.reshape(8, N, 16, 16)[:, :, :14, :14]
    xr2 = a1.reshape(8, N, 7, 2, 7, 2).transpose(0, 3, 5, 1, 2, 4)
    xr2 = jnp.pad(xr2, ((0, 0),) * 4 + ((0, 1), (0, 9))).reshape(32, N * 128)
    o2 = conv_relu_pool(xr2, prep["w2"], prep["b2"], per_img=128, bg=16)

    # --- FC head: torch.flatten(x, 1) order is feature = c*25 + h*5 + w.
    a2 = o2.reshape(16, N, 8, 16)[:, :, :5, :5]
    feats = jnp.transpose(a2, (1, 0, 2, 3)).reshape(N, 400)
    feats = jnp.pad(feats, ((0, 0), (0, 512 - 400)))
    out = fc_fused(feats, prep["fw1"], prep["fb1"], prep["fw2"], prep["fb2"],
                   prep["fw3"], prep["fb3"])
    return out[:, :25]


# ----------------------------------------------------------------------------
# Pure-JAX reference (for in-script numerical verification)
# ----------------------------------------------------------------------------
def reference_forward(params, x):
    def conv(x, w, b):
        y = jax.lax.conv_general_dilated(
            x, w, (1, 1), "VALID",
            dimension_numbers=("NCHW", "OIHW", "NCHW"))
        return y + b.reshape(1, -1, 1, 1)

    def pool(x):
        return jax.lax.reduce_window(x, -jnp.inf, jax.lax.max,
                                     (1, 1, 2, 2), (1, 1, 2, 2), "VALID")

    x = pool(jax.nn.relu(conv(x, params["conv1_w"], params["conv1_b"])))
    x = pool(jax.nn.relu(conv(x, params["conv2_w"], params["conv2_b"])))
    x = x.reshape(x.shape[0], -1)
    x = jax.nn.relu(x @ params["fc1_w"].T + params["fc1_b"])
    x = jax.nn.relu(x @ params["fc2_w"].T + params["fc2_b"])
    return x @ params["fc3_w"].T + params["fc3_b"]


if __name__ == "__main__":
    key = jax.random.PRNGKey(0)
    pkey, xkey = jax.random.split(key)
    params = init_params(pkey)
    prep = prepare_params(params)
    x = jax.random.normal(xkey, (2, 3, 32, 32), jnp.float32)

    fwd = jax.jit(net_forward)
    out = jax.block_until_ready(fwd(prep, x))
    assert out.shape == (2, 25), out.shape

    ref = jax.block_until_ready(reference_forward(params, x))
    err = float(jnp.max(jnp.abs(out - ref)))
    assert err < 1e-3, f"max abs error vs reference: {err}"
    print("KERNEL_OK")
</pallas_src>

<mosaic_0001>
module attributes {stable_mosaic.version = 11 : i64} {
  func.func @kernel(%arg0: i32, %arg1: memref<16x256xf32, #tpu.memory_space<vmem>>, %arg2: memref<32x144xf32, #tpu.memory_space<vmem>>, %arg3: memref<8x1xf32, #tpu.memory_space<vmem>>, %arg4: memref<8x256xf32, #tpu.memory_space<vmem>>, %arg5: memref<144x256xf32, #tpu.memory_space<vmem>>) attributes {dimension_semantics = [#tpu.dimension_semantics<parallel>], iteration_bounds = array<i64: 2>, scalar_prefetch = 0 : i64, scratch_operands = 1 : i64, tpu.core_type = #tpu.core_type<tc>, window_params = [{transform_indices = @transform_0, window_bounds = array<i64: 16, 256>}, {pipeline_mode = #tpu.pipeline_mode<synchronous>, transform_indices = @transform_1, window_bounds = array<i64: 32, 144>}, {pipeline_mode = #tpu.pipeline_mode<synchronous>, transform_indices = @transform_2, window_bounds = array<i64: 8, 1>}, {transform_indices = @transform_3, window_bounds = array<i64: 8, 256>}]} {
    %c0 = arith.constant 0 : index
    %c0_0 = arith.constant 0 : index
    %0 = vector.load %arg1[%c0, %c0_0] : memref<16x256xf32, #tpu.memory_space<vmem>>, vector<16x256xf32>
    %c0_1 = arith.constant 0 : index
    %c0_2 = arith.constant 0 : index
    %1 = vector.load %arg5[%c0_1, %c0_2] : memref<144x256xf32, #tpu.memory_space<vmem>>, vector<16x256xf32>
    tpu.vector_store %arg5[%c0_1, %c0_2], %0 {strides = array<i32>} : memref<144x256xf32, #tpu.memory_space<vmem>>, vector<16x256xf32>,
    %2 = vector.extract_strided_slice %0 {offsets = [0, 1], sizes = [16, 255], strides = [1, 1]} : vector<16x256xf32> to vector<16x255xf32>
    %3 = vector.extract_strided_slice %0 {offsets = [0, 0], sizes = [16, 1], strides = [1, 1]} : vector<16x256xf32> to vector<16x1xf32>
    %4 = tpu.concatenate %2, %3 in 1 : vector<16x255xf32>, vector<16x1xf32> -> vector<16x256xf32>
    %c16 = arith.constant 16 : index
    %c0_3 = arith.constant 0 : index
    %5 = vector.load %arg5[%c16, %c0_3] : memref<144x256xf32, #tpu.memory_space<vmem>>, vector<16x256xf32>
    tpu.vector_store %arg5[%c16, %c0_3], %4 {strides = array<i32>} : memref<144x256xf32, #tpu.memory_space<vmem>>, vector<16x256xf32>,
    %6 = vector.extract_strided_slice %0 {offsets = [0, 2], sizes = [16, 254], strides = [1, 1]} : vector<16x256xf32> to vector<16x254xf32>
    %7 = vector.extract_strided_slice %0 {offsets = [0, 0], sizes = [16, 2], strides = [1, 1]} : vector<16x256xf32> to vector<16x2xf32>
    %8 = tpu.concatenate %6, %7 in 1 : vector<16x254xf32>, vector<16x2xf32> -> vector<16x256xf32>
    %c32 = arith.constant 32 : index
    %c0_4 = arith.constant 0 : index
    %9 = vector.load %arg5[%c32, %c0_4] : memref<144x256xf32, #tpu.memory_space<vmem>>, vector<16x256xf32>
    tpu.vector_store %arg5[%c32, %c0_4], %8 {strides = array<i32>} : memref<144x256xf32, #tpu.memory_space<vmem>>, vector<16x256xf32>,
    %10 = vector.extract_strided_slice %0 {offsets = [0, 16], sizes = [16, 240], strides = [1, 1]} : vector<16x256xf32> to vector<16x240xf32>
    %11 = vector.extract_strided_slice %0 {offsets = [0, 0], sizes = [16, 16], strides = [1, 1]} : vector<16x256xf32> to vector<16x16xf32>
    %12 = tpu.concatenate %10, %11 in 1 : vector<16x240xf32>, vector<16x16xf32> -> vector<16x256xf32>
    %c48 = arith.constant 48 : index
    %c0_5 = arith.constant 0 : index
    %13 = vector.load %arg5[%c48, %c0_5] : memref<144x256xf32, #tpu.memory_space<vmem>>, vector<16x256xf32>
    tpu.vector_store %arg5[%c48, %c0_5], %12 {strides = array<i32>} : memref<144x256xf32, #tpu.memory_space<vmem>>, vector<16x256xf32>,
    %14 = vector.extract_strided_slice %0 {offsets = [0, 17], sizes = [16, 239], strides = [1, 1]} : vector<16x256xf32> to vector<16x239xf32>
    %15 = vector.extract_strided_slice %0 {offsets = [0, 0], sizes = [16, 17], strides = [1, 1]} : vector<16x256xf32> to vector<16x17xf32>
    %16 = tpu.concatenate %14, %15 in 1 : vector<16x239xf32>, vector<16x17xf32> -> vector<16x256xf32>
    %c64 = arith.constant 64 : index
    %c0_6 = arith.constant 0 : index
    %17 = vector.load %arg5[%c64, %c0_6] : memref<144x256xf32, #tpu.memory_space<vmem>>, vector<16x256xf32>
    tpu.vector_store %arg5[%c64, %c0_6], %16 {strides = array<i32>} : memref<144x256xf32, #tpu.memory_space<vmem>>, vector<16x256xf32>,
    %18 = vector.extract_strided_slice %0 {offsets = [0, 18], sizes = [16, 238], strides = [1, 1]} : vector<16x256xf32> to vector<16x238xf32>
    %19 = vector.extract_strided_slice %0 {offsets = [0, 0], sizes = [16, 18], strides = [1, 1]} : vector<16x256xf32> to vector<16x18xf32>
    %20 = tpu.concatenate %18, %19 in 1 : vector<16x238xf32>, vector<16x18xf32> -> vector<16x256xf32>
    %c80 = arith.constant 80 : index
    %c0_7 = arith.constant 0 : index
    %21 = vector.load %arg5[%c80, %c0_7] : memref<144x256xf32, #tpu.memory_space<vmem>>, vector<16x256xf32>
    tpu.vector_store %arg5[%c80, %c0_7], %20 {strides = array<i32>} : memref<144x256xf32, #tpu.memory_space<vmem>>, vector<16x256xf32>,
    %22 = vector.extract_strided_slice %0 {offsets = [0, 32], sizes = [16, 224], strides = [1, 1]} : vector<16x256xf32> to vector<16x224xf32>
    %23 = vector.extract_strided_slice %0 {offsets = [0, 0], sizes = [16, 32], strides = [1, 1]} : vector<16x256xf32> to vector<16x32xf32>
    %24 = tpu.concatenate %22, %23 in 1 : vector<16x224xf32>, vector<16x32xf32> -> vector<16x256xf32>
    %c96 = arith.constant 96 : index
    %c0_8 = arith.constant 0 : index
    %25 = vector.load %arg5[%c96, %c0_8] : memref<144x256xf32, #tpu.memory_space<vmem>>, vector<16x256xf32>
    tpu.vector_store %arg5[%c96, %c0_8], %24 {strides = array<i32>} : memref<144x256xf32, #tpu.memory_space<vmem>>, vector<16x256xf32>,
    %26 = vector.extract_strided_slice %0 {offsets = [0, 33], sizes = [16, 223], strides = [1, 1]} : vector<16x256xf32> to vector<16x223xf32>
    %27 = vector.extract_strided_slice %0 {offsets = [0, 0], sizes = [16, 33], strides = [1, 1]} : vector<16x256xf32> to vector<16x33xf32>
    %28 = tpu.concatenate %26, %27 in 1 : vector<16x223xf32>, vector<16x33xf32> -> vector<16x256xf32>
    %c112 = arith.constant 112 : index
    %c0_9 = arith.constant 0 : index
    %29 = vector.load %arg5[%c112, %c0_9] : memref<144x256xf32, #tpu.memory_space<vmem>>, vector<16x256xf32>
    tpu.vector_store %arg5[%c112, %c0_9], %28 {strides = array<i32>} : memref<144x256xf32, #tpu.memory_space<vmem>>, vector<16x256xf32>,
    %30 = vector.extract_strided_slice %0 {offsets = [0, 34], sizes = [16, 222], strides = [1, 1]} : vector<16x256xf32> to vector<16x222xf32>
    %31 = vector.extract_strided_slice %0 {offsets = [0, 0], sizes = [16, 34], strides = [1, 1]} : vector<16x256xf32> to vector<16x34xf32>
    %32 = tpu.concatenate %30, %31 in 1 : vector<16x222xf32>, vector<16x34xf32> -> vector<16x256xf32>
    %c128 = arith.constant 128 : index
    %c0_10 = arith.constant 0 : index
    %33 = vector.load %arg5[%c128, %c0_10] : memref<144x256xf32, #tpu.memory_space<vmem>>, vector<16x256xf32>
    tpu.vector_store %arg5[%c128, %c0_10], %32 {strides = array<i32>} : memref<144x256xf32, #tpu.memory_space<vmem>>, vector<16x256xf32>,
    %c0_11 = arith.constant 0 : index
    %c0_12 = arith.constant 0 : index
    %34 = vector.load %arg2[%c0_11, %c0_12] : memref<32x144xf32, #tpu.memory_space<vmem>>, vector<32x144xf32>
    %c0_13 = arith.constant 0 : index
    %c0_14 = arith.constant 0 : index
    %35 = vector.load %arg5[%c0_13, %c0_14] : memref<144x256xf32, #tpu.memory_space<vmem>>, vector<144x256xf32>
    %cst = arith.constant dense<0.000000e+00> : vector<32x256xf32>
    %36 = tpu.matmul %34, %35, %cst {dimension_numbers = #tpu.dot_dimension_numbers<[1], [0], [0], [1], [0, 0, 1, 1], [], []>} : vector<32x144xf32>, vector<144x256xf32>, vector<32x256xf32> -> vector<32x256xf32>
    %37 = vector.extract_strided_slice %36 {offsets = [0, 0], sizes = [8, 256], strides = [1, 1]} : vector<32x256xf32> to vector<8x256xf32>
    %38 = vector.extract_strided_slice %36 {offsets = [8, 0], sizes = [8, 256], strides = [1, 1]} : vector<32x256xf32> to vector<8x256xf32>
    %39 = arith.maximumf %37, %38 : vector<8x256xf32>
    %40 = vector.extract_strided_slice %36 {offsets = [16, 0], sizes = [8, 256], strides = [1, 1]} : vector<32x256xf32> to vector<8x256xf32>
    %41 = vector.extract_strided_slice %36 {offsets = [24, 0], sizes = [8, 256], strides = [1, 1]} : vector<32x256xf32> to vector<8x256xf32>
    %42 = arith.maximumf %40, %41 : vector<8x256xf32>
    %43 = arith.maximumf %39, %42 : vector<8x256xf32>
    %c0_15 = arith.constant 0 : index
    %c0_16 = arith.constant 0 : index
    %44 = vector.load %arg3[%c0_15, %c0_16] : memref<8x1xf32, #tpu.memory_space<vmem>>, vector<8x1xf32>
    %45 = vector.broadcast %44 : vector<8x1xf32> to vector<8x256xf32>
    %46 = arith.addf %43, %45 : vector<8x256xf32>
    %cst_17 = arith.constant 0.000000e+00 : f32
    %47 = vector.broadcast %cst_17 : f32 to vector<8x256xf32>
    %48 = arith.maximumf %46, %47 : vector<8x256xf32>
    %c0_18 = arith.constant 0 : index
    %c0_19 = arith.constant 0 : index
    %49 = vector.load %arg4[%c0_18, %c0_19] : memref<8x256xf32, #tpu.memory_space<vmem>>, vector<8x256xf32>
    tpu.vector_store %arg4[%c0_18, %c0_19], %48 {strides = array<i32>} : memref<8x256xf32, #tpu.memory_space<vmem>>, vector<8x256xf32>,
    return
  }
  func.func @transform_0(%arg0: i32) -> (i32, i32) {
    %c0_i32 = arith.constant 0 : i32
    %c0_i32_0 = arith.constant 0 : i32
    return %c0_i32, %arg0 : i32, i32
  }
  func.func @transform_1(%arg0: i32) -> (i32, i32) {
    %c0_i32 = arith.constant 0 : i32
    %c0_i32_0 = arith.constant 0 : i32
    %c0_i32_1 = arith.constant 0 : i32
    return %c0_i32, %c0_i32_0 : i32, i32
  }
  func.func @transform_2(%arg0: i32) -> (i32, i32) {
    %c0_i32 = arith.constant 0 : i32
    %c0_i32_0 = arith.constant 0 : i32
    %c0_i32_1 = arith.constant 0 : i32
    return %c0_i32, %c0_i32_0 : i32, i32
  }
  func.func @transform_3(%arg0: i32) -> (i32, i32) {
    %c0_i32 = arith.constant 0 : i32
    %c0_i32_0 = arith.constant 0 : i32
    return %c0_i32, %arg0 : i32, i32
  }
}

module attributes {stable_mosaic.version = 11 : i64} {
  func.func @kernel(%arg0: i32, %arg1: memref<32x128xf32, #tpu.memory_space<vmem>>, %arg2: memref<64x288xf32, #tpu.memory_space<vmem>>, %arg3: memref<16x1xf32, #tpu.memory_space<vmem>>, %arg4: memref<16x128xf32, #tpu.memory_space<vmem>>, %arg5: memref<288x128xf32, #tpu.memory_space<vmem>>) attributes {dimension_semantics = [#tpu.dimension_semantics<parallel>], iteration_bounds = array<i64: 2>, scalar_prefetch = 0 : i64, scratch_operands = 1 : i64, tpu.core_type = #tpu.core_type<tc>, window_params = [{transform_indices = @transform_0, window_bounds = array<i64: 32, 128>}, {pipeline_mode = #tpu.pipeline_mode<synchronous>, transform_indices = @transform_1, window_bounds = array<i64: 64, 288>}, {pipeline_mode = #tpu.pipeline_mode<synchronous>, transform_indices = @transform_2, window_bounds = array<i64: 16, 1>}, {transform_indices = @transform_3, window_bounds = array<i64: 16, 128>}]} {
    %c0 = arith.constant 0 : index
    %c0_0 = arith.constant 0 : index
    %0 = vector.load %arg1[%c0, %c0_0] : memref<32x128xf32, #tpu.memory_space<vmem>>, vector<32x128xf32>
    %c0_1 = arith.constant 0 : index
    %c0_2 = arith.constant 0 : index
    %1 = vector.load %arg5[%c0_1, %c0_2] : memref<288x128xf32, #tpu.memory_space<vmem>>, vector<32x128xf32>
    tpu.vector_store %arg5[%c0_1, %c0_2], %0 {strides = array<i32>} : memref<288x128xf32, #tpu.memory_space<vmem>>, vector<32x128xf32>,
    %2 = vector.extract_strided_slice %0 {offsets = [0, 1], sizes = [32, 127], strides = [1, 1]} : vector<32x128xf32> to vector<32x127xf32>
    %3 = vector.extract_strided_slice %0 {offsets = [0, 0], sizes = [32, 1], strides = [1, 1]} : vector<32x128xf32> to vector<32x1xf32>
    %4 = tpu.concatenate %2, %3 in 1 : vector<32x127xf32>, vector<32x1xf32> -> vector<32x128xf32>
    %c32 = arith.constant 32 : index
    %c0_3 = arith.constant 0 : index
    %5 = vector.load %arg5[%c32, %c0_3] : memref<288x128xf32, #tpu.memory_space<vmem>>, vector<32x128xf32>
    tpu.vector_store %arg5[%c32, %c0_3], %4 {strides = array<i32>} : memref<288x128xf32, #tpu.memory_space<vmem>>, vector<32x128xf32>,
    %6 = vector.extract_strided_slice %0 {offsets = [0, 2], sizes = [32, 126], strides = [1, 1]} : vector<32x128xf32> to vector<32x126xf32>
    %7 = vector.extract_strided_slice %0 {offsets = [0, 0], sizes = [32, 2], strides = [1, 1]} : vector<32x128xf32> to vector<32x2xf32>
    %8 = tpu.concatenate %6, %7 in 1 : vector<32x126xf32>, vector<32x2xf32> -> vector<32x128xf32>
    %c64 = arith.constant 64 : index
    %c0_4 = arith.constant 0 : index
    %9 = vector.load %arg5[%c64, %c0_4] : memref<288x128xf32, #tpu.memory_space<vmem>>, vector<32x128xf32>
    tpu.vector_store %arg5[%c64, %c0_4], %8 {strides = array<i32>} : memref<288x128xf32, #tpu.memory_space<vmem>>, vector<32x128xf32>,
    %10 = vector.extract_strided_slice %0 {offsets = [0, 16], sizes = [32, 112], strides = [1, 1]} : vector<32x128xf32> to vector<32x112xf32>
    %11 = vector.extract_strided_slice %0 {offsets = [0, 0], sizes = [32, 16], strides = [1, 1]} : vector<32x128xf32> to vector<32x16xf32>
    %12 = tpu.concatenate %10, %11 in 1 : vector<32x112xf32>, vector<32x16xf32> -> vector<32x128xf32>
    %c96 = arith.constant 96 : index
    %c0_5 = arith.constant 0 : index
    %13 = vector.load %arg5[%c96, %c0_5] : memref<288x128xf32, #tpu.memory_space<vmem>>, vector<32x128xf32>
    tpu.vector_store %arg5[%c96, %c0_5], %12 {strides = array<i32>} : memref<288x128xf32, #tpu.memory_space<vmem>>, vector<32x128xf32>,
    %14 = vector.extract_strided_slice %0 {offsets = [0, 17], sizes = [32, 111], strides = [1, 1]} : vector<32x128xf32> to vector<32x111xf32>
    %15 = vector.extract_strided_slice %0 {offsets = [0, 0], sizes = [32, 17], strides = [1, 1]} : vector<32x128xf32> to vector<32x17xf32>
    %16 = tpu.concatenate %14, %15 in 1 : vector<32x111xf32>, vector<32x17xf32> -> vector<32x128xf32>
    %c128 = arith.constant 128 : index
    %c0_6 = arith.constant 0 : index
    %17 = vector.load %arg5[%c128, %c0_6] : memref<288x128xf32, #tpu.memory_space<vmem>>, vector<32x128xf32>
    tpu.vector_store %arg5[%c128, %c0_6], %16 {strides = array<i32>} : memref<288x128xf32, #tpu.memory_space<vmem>>, vector<32x128xf32>,
    %18 = vector.extract_strided_slice %0 {offsets = [0, 18], sizes = [32, 110], strides = [1, 1]} : vector<32x128xf32> to vector<32x110xf32>
    %19 = vector.extract_strided_slice %0 {offsets = [0, 0], sizes = [32, 18], strides = [1, 1]} : vector<32x128xf32> to vector<32x18xf32>
    %20 = tpu.concatenate %18, %19 in 1 : vector<32x110xf32>, vector<32x18xf32> -> vector<32x128xf32>
    %c160 = arith.constant 160 : index
    %c0_7 = arith.constant 0 : index
    %21 = vector.load %arg5[%c160, %c0_7] : memref<288x128xf32, #tpu.memory_space<vmem>>, vector<32x128xf32>
    tpu.vector_store %arg5[%c160, %c0_7], %20 {strides = array<i32>} : memref<288x128xf32, #tpu.memory_space<vmem>>, vector<32x128xf32>,
    %22 = vector.extract_strided_slice %0 {offsets = [0, 32], sizes = [32, 96], strides = [1, 1]} : vector<32x128xf32> to vector<32x96xf32>
    %23 = vector.extract_strided_slice %0 {offsets = [0, 0], sizes = [32, 32], strides = [1, 1]} : vector<32x128xf32> to vector<32x32xf32>
    %24 = tpu.concatenate %22, %23 in 1 : vector<32x96xf32>, vector<32x32xf32> -> vector<32x128xf32>
    %c192 = arith.constant 192 : index
    %c0_8 = arith.constant 0 : index
    %25 = vector.load %arg5[%c192, %c0_8] : memref<288x128xf32, #tpu.memory_space<vmem>>, vector<32x128xf32>
    tpu.vector_store %arg5[%c192, %c0_8], %24 {strides = array<i32>} : memref<288x128xf32, #tpu.memory_space<vmem>>, vector<32x128xf32>,
    %26 = vector.extract_strided_slice %0 {offsets = [0, 33], sizes = [32, 95], strides = [1, 1]} : vector<32x128xf32> to vector<32x95xf32>
    %27 = vector.extract_strided_slice %0 {offsets = [0, 0], sizes = [32, 33], strides = [1, 1]} : vector<32x128xf32> to vector<32x33xf32>
    %28 = tpu.concatenate %26, %27 in 1 : vector<32x95xf32>, vector<32x33xf32> -> vector<32x128xf32>
    %c224 = arith.constant 224 : index
    %c0_9 = arith.constant 0 : index
    %29 = vector.load %arg5[%c224, %c0_9] : memref<288x128xf32, #tpu.memory_space<vmem>>, vector<32x128xf32>
    tpu.vector_store %arg5[%c224, %c0_9], %28 {strides = array<i32>} : memref<288x128xf32, #tpu.memory_space<vmem>>, vector<32x128xf32>,
    %30 = vector.extract_strided_slice %0 {offsets = [0, 34], sizes = [32, 94], strides = [1, 1]} : vector<32x128xf32> to vector<32x94xf32>
    %31 = vector.extract_strided_slice %0 {offsets = [0, 0], sizes = [32, 34], strides = [1, 1]} : vector<32x128xf32> to vector<32x34xf32>
    %32 = tpu.concatenate %30, %31 in 1 : vector<32x94xf32>, vector<32x34xf32> -> vector<32x128xf32>
    %c256 = arith.constant 256 : index
    %c0_10 = arith.constant 0 : index
    %33 = vector.load %arg5[%c256, %c0_10] : memref<288x128xf32, #tpu.memory_space<vmem>>, vector<32x128xf32>
    tpu.vector_store %arg5[%c256, %c0_10], %32 {strides = array<i32>} : memref<288x128xf32, #tpu.memory_space<vmem>>, vector<32x128xf32>,
    %c0_11 = arith.constant 0 : index
    %c0_12 = arith.constant 0 : index
    %34 = vector.load %arg2[%c0_11, %c0_12] : memref<64x288xf32, #tpu.memory_space<vmem>>, vector<64x288xf32>
    %c0_13 = arith.constant 0 : index
    %c0_14 = arith.constant 0 : index
    %35 = vector.load %arg5[%c0_13, %c0_14] : memref<288x128xf32, #tpu.memory_space<vmem>>, vector<288x128xf32>
    %cst = arith.constant dense<0.000000e+00> : vector<64x128xf32>
    %36 = tpu.matmul %34, %35, %cst {dimension_numbers = #tpu.dot_dimension_numbers<[1], [0], [0], [1], [0, 0, 1, 1], [], []>} : vector<64x288xf32>, vector<288x128xf32>, vector<64x128xf32> -> vector<64x128xf32>
    %37 = vector.extract_strided_slice %36 {offsets = [0, 0], sizes = [16, 128], strides = [1, 1]} : vector<64x128xf32> to vector<16x128xf32>
    %38 = vector.extract_strided_slice %36 {offsets = [16, 0], sizes = [16, 128], strides = [1, 1]} : vector<64x128xf32> to vector<16x128xf32>
    %39 = arith.maximumf %37, %38 : vector<16x128xf32>
    %40 = vector.extract_strided_slice %36 {offsets = [32, 0], sizes = [16, 128], strides = [1, 1]} : vector<64x128xf32> to vector<16x128xf32>
    %41 = vector.extract_strided_slice %36 {offsets = [48, 0], sizes = [16, 128], strides = [1, 1]} : vector<64x128xf32> to vector<16x128xf32>
    %42 = arith.maximumf %40, %41 : vector<16x128xf32>
    %43 = arith.maximumf %39, %42 : vector<16x128xf32>
    %c0_15 = arith.constant 0 : index
    %c0_16 = arith.constant 0 : index
    %44 = vector.load %arg3[%c0_15, %c0_16] : memref<16x1xf32, #tpu.memory_space<vmem>>, vector<16x1xf32>
    %45 = vector.broadcast %44 : vector<16x1xf32> to vector<16x128xf32>
    %46 = arith.addf %43, %45 : vector<16x128xf32>
    %cst_17 = arith.constant 0.000000e+00 : f32
    %47 = vector.broadcast %cst_17 : f32 to vector<16x128xf32>
    %48 = arith.maximumf %46, %47 : vector<16x128xf32>
    %c0_18 = arith.constant 0 : index
    %c0_19 = arith.constant 0 : index
    %49 = vector.load %arg4[%c0_18, %c0_19] : memref<16x128xf32, #tpu.memory_space<vmem>>, vector<16x128xf32>
    tpu.vector_store %arg4[%c0_18, %c0_19], %48 {strides = array<i32>} : memref<16x128xf32, #tpu.memory_space<vmem>>, vector<16x128xf32>,
    return
  }
  func.func @transform_0(%arg0: i32) -> (i32, i32) {
    %c0_i32 = arith.constant 0 : i32
    %c0_i32_0 = arith.constant 0 : i32
    return %c0_i32, %arg0 : i32, i32
  }
  func.func @transform_1(%arg0: i32) -> (i32, i32) {
    %c0_i32 = arith.constant 0 : i32
    %c0_i32_0 = arith.constant 0 : i32
    %c0_i32_1 = arith.constant 0 : i32
    return %c0_i32, %c0_i32_0 : i32, i32
  }
  func.func @transform_2(%arg0: i32) -> (i32, i32) {
    %c0_i32 = arith.constant 0 : i32
    %c0_i32_0 = arith.constant 0 : i32
    %c0_i32_1 = arith.constant 0 : i32
    return %c0_i32, %c0_i32_0 : i32, i32
  }
  func.func @transform_3(%arg0: i32) -> (i32, i32) {
    %c0_i32 = arith.constant 0 : i32
    %c0_i32_0 = arith.constant 0 : i32
    return %c0_i32, %arg0 : i32, i32
  }
}

module attributes {stable_mosaic.version = 11 : i64} {
  func.func @_mlp3_kernel(%arg0: i32, %arg1: memref<2x512xf32, #tpu.memory_space<vmem>>, %arg2: memref<512x128xf32, #tpu.memory_space<vmem>>, %arg3: memref<1x128xf32, #tpu.memory_space<vmem>>, %arg4: memref<128x128xf32, #tpu.memory_space<vmem>>, %arg5: memref<1x128xf32, #tpu.memory_space<vmem>>, %arg6: memref<128x128xf32, #tpu.memory_space<vmem>>, %arg7: memref<1x128xf32, #tpu.memory_space<vmem>>, %arg8: memref<2x128xf32, #tpu.memory_space<vmem>>) attributes {dimension_semantics = [#tpu.dimension_semantics<parallel>], iteration_bounds = array<i64: 1>, scalar_prefetch = 0 : i64, scratch_operands = 0 : i64, tpu.core_type = #tpu.core_type<tc>, window_params = [{transform_indices = @transform_0, window_bounds = array<i64: 2, 512>}, {pipeline_mode = #tpu.pipeline_mode<synchronous>, transform_indices = @transform_1, window_bounds = array<i64: 512, 128>}, {pipeline_mode = #tpu.pipeline_mode<synchronous>, transform_indices = @transform_2, window_bounds = array<i64: 1, 128>}, {pipeline_mode = #tpu.pipeline_mode<synchronous>, transform_indices = @transform_3, window_bounds = array<i64: 128, 128>}, {pipeline_mode = #tpu.pipeline_mode<synchronous>, transform_indices = @transform_4, window_bounds = array<i64: 1, 128>}, {pipeline_mode = #tpu.pipeline_mode<synchronous>, transform_indices = @transform_5, window_bounds = array<i64: 128, 128>}, {pipeline_mode = #tpu.pipeline_mode<synchronous>, transform_indices = @transform_6, window_bounds = array<i64: 1, 128>}, {transform_indices = @transform_7, window_bounds = array<i64: 2, 128>}]} {
    %c0 = arith.constant 0 : index
    %c0_0 = arith.constant 0 : index
    %0 = vector.load %arg1[%c0, %c0_0] : memref<2x512xf32, #tpu.memory_space<vmem>>, vector<2x512xf32>
    %c0_1 = arith.constant 0 : index
    %c0_2 = arith.constant 0 : index
    %1 = vector.load %arg2[%c0_1, %c0_2] : memref<512x128xf32, #tpu.memory_space<vmem>>, vector<512x128xf32>
    %cst = arith.constant dense<0.000000e+00> : vector<2x128xf32>
    %2 = tpu.matmul %0, %1, %cst {dimension_numbers = #tpu.dot_dimension_numbers<[1], [0], [0], [1], [0, 0, 1, 1], [], []>} : vector<2x512xf32>, vector<512x128xf32>, vector<2x128xf32> -> vector<2x128xf32>
    %c0_3 = arith.constant 0 : index
    %c0_4 = arith.constant 0 : index
    %3 = vector.load %arg3[%c0_3, %c0_4] : memref<1x128xf32, #tpu.memory_space<vmem>>, vector<1x128xf32>
    %4 = vector.broadcast %3 : vector<1x128xf32> to vector<2x128xf32>
    %5 = arith.addf %2, %4 : vector<2x128xf32>
    %cst_5 = arith.constant 0.000000e+00 : f32
    %6 = vector.broadcast %cst_5 : f32 to vector<2x128xf32>
    %7 = arith.maximumf %5, %6 : vector<2x128xf32>
    %c0_6 = arith.constant 0 : index
    %c0_7 = arith.constant 0 : index
    %8 = vector.load %arg4[%c0_6, %c0_7] : memref<128x128xf32, #tpu.memory_space<vmem>>, vector<128x128xf32>
    %cst_8 = arith.constant dense<0.000000e+00> : vector<2x128xf32>
    %9 = tpu.matmul %7, %8, %cst_8 {dimension_numbers = #tpu.dot_dimension_numbers<[1], [0], [0], [1], [0, 0, 1, 1], [], []>} : vector<2x128xf32>, vector<128x128xf32>, vector<2x128xf32> -> vector<2x128xf32>
    %c0_9 = arith.constant 0 : index
    %c0_10 = arith.constant 0 : index
    %10 = vector.load %arg5[%c0_9, %c0_10] : memref<1x128xf32, #tpu.memory_space<vmem>>, vector<1x128xf32>
    %11 = vector.broadcast %10 : vector<1x128xf32> to vector<2x128xf32>
    %12 = arith.addf %9, %11 : vector<2x128xf32>
    %cst_11 = arith.constant 0.000000e+00 : f32
    %13 = vector.broadcast %cst_11 : f32 to vector<2x128xf32>
    %14 = arith.maximumf %12, %13 : vector<2x128xf32>
    %c0_12 = arith.constant 0 : index
    %c0_13 = arith.constant 0 : index
    %15 = vector.load %arg6[%c0_12, %c0_13] : memref<128x128xf32, #tpu.memory_space<vmem>>, vector<128x128xf32>
    %cst_14 = arith.constant dense<0.000000e+00> : vector<2x128xf32>
    %16 = tpu.matmul %14, %15, %cst_14 {dimension_numbers = #tpu.dot_dimension_numbers<[1], [0], [0], [1], [0, 0, 1, 1], [], []>} : vector<2x128xf32>, vector<128x128xf32>, vector<2x128xf32> -> vector<2x128xf32>
    %c0_15 = arith.constant 0 : index
    %c0_16 = arith.constant 0 : index
    %17 = vector.load %arg7[%c0_15, %c0_16] : memref<1x128xf32, #tpu.memory_space<vmem>>, vector<1x128xf32>
    %18 = vector.broadcast %17 : vector<1x128xf32> to vector<2x128xf32>
    %19 = arith.addf %16, %18 : vector<2x128xf32>
    %c0_17 = arith.constant 0 : index
    %c0_18 = arith.constant 0 : index
    %20 = vector.load %arg8[%c0_17, %c0_18] : memref<2x128xf32, #tpu.memory_space<vmem>>, vector<2x128xf32>
    tpu.vector_store %arg8[%c0_17, %c0_18], %19 {strides = array<i32>} : memref<2x128xf32, #tpu.memory_space<vmem>>, vector<2x128xf32>,
    return
  }
  func.func @transform_0(%arg0: i32) -> (i32, i32) {
    %c0_i32 = arith.constant 0 : i32
    %c0_i32_0 = arith.constant 0 : i32
    return %arg0, %c0_i32 : i32, i32
  }
  func.func @transform_1(%arg0: i32) -> (i32, i32) {
    %c0_i32 = arith.constant 0 : i32
    %c0_i32_0 = arith.constant 0 : i32
    %c0_i32_1 = arith.constant 0 : i32
    return %c0_i32, %c0_i32_0 : i32, i32
  }
  func.func @transform_2(%arg0: i32) -> (i32, i32) {
    %c0_i32 = arith.constant 0 : i32
    %c0_i32_0 = arith.constant 0 : i32
    %c0_i32_1 = arith.constant 0 : i32
    return %c0_i32, %c0_i32_0 : i32, i32
  }
  func.func @transform_3(%arg0: i32) -> (i32, i32) {
    %c0_i32 = arith.constant 0 : i32
    %c0_i32_0 = arith.constant 0 : i32
    %c0_i32_1 = arith.constant 0 : i32
    return %c0_i32, %c0_i32_0 : i32, i32
  }
  func.func @transform_4(%arg0: i32) -> (i32, i32) {
    %c0_i32 = arith.constant 0 : i32
    %c0_i32_0 = arith.constant 0 : i32
    %c0_i32_1 = arith.constant 0 : i32
    return %c0_i32, %c0_i32_0 : i32, i32
  }
  func.func @transform_5(%arg0: i32) -> (i32, i32) {
    %c0_i32 = arith.constant 0 : i32
    %c0_i32_0 = arith.constant 0 : i32
    %c0_i32_1 = arith.constant 0 : i32
    return %c0_i32, %c0_i32_0 : i32, i32
  }
  func.func @transform_6(%arg0: i32) -> (i32, i32) {
    %c0_i32 = arith.constant 0 : i32
    %c0_i32_0 = arith.constant 0 : i32
    %c0_i32_1 = arith.constant 0 : i32
    return %c0_i32, %c0_i32_0 : i32, i32
  }
  func.func @transform_7(%arg0: i32) -> (i32, i32) {
    %c0_i32 = arith.constant 0 : i32
    %c0_i32_0 = arith.constant 0 : i32
    return %arg0, %c0_i32 : i32, i32
  }
}

</mosaic_0001>

<llo_original>
// kernel: net_forward.3
$region0: #{net_forward.3}
  #allocation0 [shape = 'u32[]', space=smem, size = 0x4, offset = 0x4, fixed_abs, tag = 'smem constant byte address 0x4 - core index']
  #allocation1 [shape = 'u32[144,128]{1,0:T(1,128)}', space=vmem, size = 0x12000, scoped, tag = 'internal scratch']
  #allocation2 [shape = 'f32[144,256]{1,0:T(8,128)}', space=vmem, size = 0x24000, scoped, tag = 'scratch operand']
  %s0 = inlined_call_operand.vmem [shape: f32[16,512], index: 0, kind: input, shape index: {}]
  %s1 = inlined_call_operand.vmem [shape: f32[32,144], index: 1, kind: input, shape index: {}]
  %s2 = inlined_call_operand.vmem [shape: f32[8,1], index: 2, kind: input, shape index: {}]
  %s3 = inlined_call_operand.vmem [shape: f32[8,512], index: 3, kind: output, shape index: {}]
  %s4 = sld [smem:[#allocation0]]
  $region68: #{net_forward.3} parent=0
    _
  %s6 = ssub.s32 1, %s4
  %s7 = scalar_select 0, %s6, %s4
  $region1: #{net_forward.3} parent=0
    #allocation3 [shape = 'u8[32768]{0}', space=vmem, size = 0x8000, scoped, tag = 'input window, operand 0']
    loop: start=0, step=1, limit=4
    $region2: #{net_forward.3} parent=1 // loop_pre_header
      _
    $region3: #{net_forward.3} parent=1 // loop_header
      %s9 = sphi 0, %s13
      %p10 = scmp.ge.s32.totalorder %s9, 4
      %s19 = sphi 0, %s21
      %s22 = sphi 0, %s19
      %s23 = sphi 0, %s22
      %s39 = sphi 0, %s23
      %s43 = sphi 0, %s43
      %s45 = sphi 0, %s43
      %s46 = sphi 0, %s45
      %s60 = sphi 0, %s46
      %s64 = sphi 0, %s64
      %s66 = sphi 0, %s64
      %s67 = sphi 0, %s66
      %s81 = sphi 0, %s67
      %s87 = sphi 0, %s89
      %s90 = sphi 0, %s87
      %s91 = sphi 0, %s90
      %s107 = sphi 0, %s91
    $region4: #{net_forward.3} parent=1 // loop_header_branch
      %12 = sbr.rel (%p10) target = $region8
    $region5: #{net_forward.3} parent=1 // loop_body
      %s14 = ssub.s32 %s9, 1
      %s15 = ssub.s32 %s9, 2
      %s16 = sadd.s32 %s9, 1
      %s17 = ssub.s32 %s9, %s16
      %p18 = scmp.eq.s32.totalorder %s17, 0
      %s20 = sadd.s32 %s19, 1
      %s21 = scalar_select %p18, %s19, %s20
      %p24 = pneg %p18
      %p25 = scmp.eq.s32.totalorder %s9, 1
      %p26 = por %p24, %p25
      %p27 = scmp.ne.s32.totalorder %s19, %s22
      %p28 = scmp.eq.s32.totalorder %s9, 0
      %p29 = por %p27, %p28
      %p30 = scmp.ne.s32.totalorder %s19, %s22
      %p31 = scmp.eq.s32.totalorder %s14, 1
      %p32 = por %p30, %p31
      %p33 = scmp.ne.s32.totalorder %s22, %s23
      %p34 = scmp.eq.s32.totalorder %s14, 0
      %p35 = por %p33, %p34
      %p36 = scmp.ne.s32.totalorder %s22, %s23
      %p37 = scmp.eq.s32.totalorder %s15, 1
      %p38 = por %p36, %p37
      %p40 = scmp.ne.s32.totalorder %s23, %s39
      %p41 = scmp.eq.s32.totalorder %s15, 0
      %p42 = por %p40, %p41
      %s44 = sadd.s32 %s43, 1
      %p47 = scmp.eq.s32.totalorder %s9, 1
      %p48 = scmp.ne.s32.totalorder %s43, %s45
      %p49 = scmp.eq.s32.totalorder %s9, 0
      %p50 = por %p48, %p49
      %p51 = scmp.ne.s32.totalorder %s43, %s45
      %p52 = scmp.eq.s32.totalorder %s14, 1
      %p53 = por %p51, %p52
      %p54 = scmp.ne.s32.totalorder %s45, %s46
      %p55 = scmp.eq.s32.totalorder %s14, 0
      %p56 = por %p54, %p55
      %p57 = scmp.ne.s32.totalorder %s45, %s46
      %p58 = scmp.eq.s32.totalorder %s15, 1
      %p59 = por %p57, %p58
      %p61 = scmp.ne.s32.totalorder %s46, %s60
      %p62 = scmp.eq.s32.totalorder %s15, 0
      %p63 = por %p61, %p62
      %s65 = sadd.s32 %s64, 1
      %p68 = scmp.eq.s32.totalorder %s9, 1
      %p69 = scmp.ne.s32.totalorder %s64, %s66
      %p70 = scmp.eq.s32.totalorder %s9, 0
      %p71 = por %p69, %p70
      %p72 = scmp.ne.s32.totalorder %s64, %s66
      %p73 = scmp.eq.s32.totalorder %s14, 1
      %p74 = por %p72, %p73
      %p75 = scmp.ne.s32.totalorder %s66, %s67
      %p76 = scmp.eq.s32.totalorder %s14, 0
      %p77 = por %p75, %p76
      %p78 = scmp.ne.s32.totalorder %s66, %s67
      %p79 = scmp.eq.s32.totalorder %s15, 1
      %p80 = por %p78, %p79
      %p82 = scmp.ne.s32.totalorder %s67, %s81
      %p83 = scmp.eq.s32.totalorder %s15, 0
      %p84 = por %p82, %p83
      %s85 = ssub.s32 %s9, %s16
      %p86 = scmp.eq.s32.totalorder %s85, 0
      %s88 = sadd.s32 %s87, 1
      %s89 = scalar_select %p86, %s87, %s88
      %p92 = pneg %p86
      %p93 = scmp.eq.s32.totalorder %s9, 1
      %p94 = por %p92, %p93
      %p95 = scmp.ne.s32.totalorder %s87, %s90
      %p96 = scmp.eq.s32.totalorder %s9, 0
      %p97 = por %p95, %p96
      %p98 = scmp.ne.s32.totalorder %s87, %s90
      %p99 = scmp.eq.s32.totalorder %s14, 1
      %p100 = por %p98, %p99
      %p101 = scmp.ne.s32.totalorder %s90, %s91
      %p102 = scmp.eq.s32.totalorder %s14, 0
      %p103 = por %p101, %p102
      %p104 = scmp.ne.s32.totalorder %s90, %s91
      %p105 = scmp.eq.s32.totalorder %s15, 1
      %p106 = por %p104, %p105
      %p108 = scmp.ne.s32.totalorder %s91, %s107
      %p109 = scmp.eq.s32.totalorder %s15, 0
      %p110 = por %p108, %p109
      %p111 = scmp.le.s32.totalorder 1, %s9
      %p112 = scmp.lt.s32.totalorder %s9, 3
      %p113 = pnand %p111, %p112
      %p114 = pneg %p113
      // Predicated region
      $region9: #{net_forward.3} parent=5 // pred_check
        _
      $region10: #{net_forward.3} parent=5 // pred_check_branch
        %116 = sbr.rel (%p113) target = $region12
      $region11: #{net_forward.3} parent=5 // pred_region
        %s117 = ssub.s32 %s9, 1
        // Predicated region
        $region13: #{net_forward.3} parent=11 // pred_check
          %p118 = pneg %p56
        $region14: #{net_forward.3} parent=11 // pred_check_branch
          %120 = sbr.rel (%p118) target = $region16
        $region15: #{net_forward.3} parent=11 // pred_region
          _
        $region16: #{net_forward.3} parent=11 // pred_fallthru
          _
        // Predicated region
        $region17: #{net_forward.3} parent=11 // pred_check
          %p121 = pneg %p77
        $region18: #{net_forward.3} parent=11 // pred_check_branch
          %123 = sbr.rel (%p121) target = $region20
        $region19: #{net_forward.3} parent=11 // pred_region
          _
        $region20: #{net_forward.3} parent=11 // pred_fallthru
          _
      $region12: #{net_forward.3} parent=5 // pred_fallthru
        _
      %p124 = scmp.lt.s32.totalorder %s9, 2
      // Predicated region
      $region21: #{net_forward.3} parent=5 // pred_check
        %p125 = pneg %p124
      $region22: #{net_forward.3} parent=5 // pred_check_branch
        %127 = sbr.rel (%p125) target = $region24
      $region23: #{net_forward.3} parent=5 // pred_region
        // Predicated region
        $region25: #{net_forward.3} parent=23 // pred_check
          %p128 = pneg %p29
        $region26: #{net_forward.3} parent=23 // pred_check_branch
          %130 = sbr.rel (%p128) target = $region28
        $region27: #{net_forward.3} parent=23 // pred_region
          %s131 = sand.u32 %s19, 1
          %s132 = sand.u32 %s19, 1
          %s133 = smul.addr %s132, 32
          %s134 = scalar_lea.vmem [#allocation3], %s133
          %s135 = smul.u32 2, %s9
          %s136 = smul.addr %s135, 8
          %s137 = scalar_lea.vmem %s0, %s136
          // Predicated region
          $region29: #{net_forward.3} parent=27 // pred_check
            _
          $region30: #{net_forward.3} parent=27 // pred_check_branch
            %139 = sbr.rel (0) target = $region32
          $region31: #{net_forward.3} parent=27 // pred_region
            // Predicated region
            $region33: #{net_forward.3} parent=31 // pred_check
              _
            $region34: #{net_forward.3} parent=31 // pred_check_branch
              %141 = sbr.rel (0) target = $region36
            $region35: #{net_forward.3} parent=31 // pred_region
              loop: start=0, step=1, limit=1
              $region37: #{net_forward.3} parent=35 // loop_pre_header
                _
              $region38: #{net_forward.3} parent=35 // loop_header
                %s143 = sphi 0, %s147
                %p144 = scmp.ge.s32.totalorder %s143, 1
                %s148 = sphi %s137, %s137
                %s149 = sphi %s134, %s134
              $region39: #{net_forward.3} parent=35 // loop_header_branch
                %146 = sbr.rel (%p144) target = $region43
              $region40: #{net_forward.3} parent=35 // loop_body
                %v150 = vld [vmem:[%s148] sm:$0xff]
                %151 = vst [vmem:[%s149] sm:$0xff] %v150
                %v152 = vld [vmem:[%s148 + $0x8] sm:$0xff]
                %153 = vst [vmem:[%s149 + $0x8] sm:$0xff] %v152
                %v154 = vld [vmem:[%s148 + $0x20] sm:$0xff]
                %155 = vst [vmem:[%s149 + $0x10] sm:$0xff] %v154
                %v156 = vld [vmem:[%s148 + $0x28] sm:$0xff]
                %157 = vst [vmem:[%s149 + $0x18] sm:$0xff] %v156
              $region41: #{net_forward.3} parent=35 // loop_footer
                %s147 = sadd.s32 1, %s143
              $region42: #{net_forward.3} parent=35 // loop_footer_branch
                %142 = sbr.rel target = $region38
              $region43: #{net_forward.3} parent=35 // loop_exit
                _
            $region36: #{net_forward.3} parent=31 // pred_fallthru
              _
            // Predicated region
            $region44: #{net_forward.3} parent=31 // pred_check
              _
            $region45: #{net_forward.3} parent=31 // pred_check_branch
              %159 = sbr.rel target = $region47
            $region46: #{net_forward.3} parent=31 // pred_region
              _
            $region47: #{net_forward.3} parent=31 // pred_fallthru
              _
          $region32: #{net_forward.3} parent=27 // pred_fallthru
            _
          %160 = vnop
        $region28: #{net_forward.3} parent=23 // pred_fallthru
          _
      $region24: #{net_forward.3} parent=5 // pred_fallthru
        _
      %p161 = scmp.le.s32.totalorder 1, %s9
      %p162 = scmp.lt.s32.totalorder %s9, 3
      %p163 = pnand %p161, %p162
      %p164 = pneg %p163
      // Predicated region
      $region48: #{net_forward.3} parent=5 // pred_check
        _
      $region49: #{net_forward.3} parent=5 // pred_check_branch
        %166 = sbr.rel (%p163) target = $region51
      $region50: #{net_forward.3} parent=5 // pred_region
        %s167 = ssub.s32 %s9, 1
        %s168 = sand.u32 %s22, 1
        %s169 = sand.u32 %s22, 1
        %s170 = smul.addr %s169, 32
        %s171 = scalar_lea.vmem [#allocation3], %s170
        // Predicated region
        $region52: #{net_forward.3} parent=50 // pred_check
          %p172 = pneg %p35
        $region53: #{net_forward.3} parent=50 // pred_check_branch
          %174 = sbr.rel (%p172) target = $region55
        $region54: #{net_forward.3} parent=50 // pred_region
          _
        $region55: #{net_forward.3} parent=50 // pred_fallthru
          _
        %s175 = sand.u32 %s22, 1
        %s176 = sand.u32 %s22, 1
        %s177 = smul.addr %s176, 32
        %s178 = scalar_lea.vmem [#allocation3], %s177
        %p179 = pneg %p35
        %p180 = pneg %p32
        %p181 = pneg %p56
        %p182 = pneg %p53
        %p183 = pneg %p77
        %p184 = pneg %p74
        %p185 = pneg %p103
        %p186 = pneg %p100
        %s187 = smul.u32 2, %s14
        %p188 = scmp.lt.s32.totalorder %s187, 3
        %s189 = scalar_select %p188, %s187, 3
        %s190 = smul.addr %s189, 8
        %s191 = scalar_lea.vmem %s3, %s190
        %s192 = smul.u32 2, %s14
        %s193 = smul.u32 2, %s14
        %p194 = scmp.lt.s32.totalorder %s193, 3
        %s195 = scalar_select %p194, %s193, 3
        %s196 = smul.addr %s195, 8
        %s197 = scalar_lea.vmem %s3, %s196
        %s198 = smul.u32 2, %s14
        %v199 = vld [vmem:[%s171] sm:$0xff]
        %v200 = vld [vmem:[%s171 + $0x8] sm:$0xff]
        %v201 = vld [vmem:[%s171 + $0x10] sm:$0xff]
        %v202 = vld [vmem:[%s171 + $0x18] sm:$0xff]
        %203 = vst [vmem:[#allocation2] sm:$0xff] %v199
        %204 = vst [vmem:[#allocation2 + $0x8] sm:$0xff] %v200
        %205 = vst [vmem:[#allocation2 + $0x10] sm:$0xff] %v201
        %206 = vst [vmem:[#allocation2 + $0x18] sm:$0xff] %v202
        %211 = vrot.lane.b32.xlu0 %v199, 127
        %v212 = vpop.permute.xlu0 %211
        %213 = vrot.lane.b32.xlu0 %v200, 127
        %v214 = vpop.permute.xlu0 %213
        %215 = vrot.lane.b32.xlu0 %v201, 127
        %v216 = vpop.permute.xlu0 %215
        %217 = vrot.lane.b32.xlu0 %v202, 127
        %v218 = vpop.permute.xlu0 %217
        %vm219 = vcmask 1039360
        %v220 = vsel %vm219, %v212, %v214
        %v221 = vsel %vm219, %v216, %v218
        %v228 = vsel %vm219, %v214, %v212
        %v229 = vsel %vm219, %v218, %v216
        %230 = vst [vmem:[#allocation2 + $0x20] sm:$0xff] %v220
        %231 = vst [vmem:[#allocation2 + $0x28] sm:$0xff] %v228
        %232 = vst [vmem:[#allocation2 + $0x30] sm:$0xff] %v221
        %233 = vst [vmem:[#allocation2 + $0x38] sm:$0xff] %v229
        %234 = vrot.lane.b32.xlu0 %v199, 126
        %v235 = vpop.permute.xlu0 %234
        %236 = vrot.lane.b32.xlu0 %v200, 126
        %v237 = vpop.permute.xlu0 %236
        %238 = vrot.lane.b32.xlu0 %v201, 126
        %v239 = vpop.permute.xlu0 %238
        %240 = vrot.lane.b32.xlu0 %v202, 126
        %v241 = vpop.permute.xlu0 %240
        %vm242 = vcmask 1031168
        %v243 = vsel %vm242, %v235, %v237
        %v244 = vsel %vm242, %v239, %v241
        %v251 = vsel %vm242, %v237, %v235
        %v252 = vsel %vm242, %v241, %v239
        %253 = vst [vmem:[#allocation2 + $0x40] sm:$0xff] %v243
        %254 = vst [vmem:[#allocation2 + $0x48] sm:$0xff] %v251
        %255 = vst [vmem:[#allocation2 + $0x50] sm:$0xff] %v244
        %256 = vst [vmem:[#allocation2 + $0x58] sm:$0xff] %v252
        %257 = vrot.lane.b32.xlu0 %v199, 112
        %v258 = vpop.permute.xlu0 %257
        %259 = vrot.lane.b32.xlu0 %v200, 112
        %v260 = vpop.permute.xlu0 %259
        %261 = vrot.lane.b32.xlu0 %v201, 112
        %v262 = vpop.permute.xlu0 %261
        %263 = vrot.lane.b32.xlu0 %v202, 112
        %v264 = vpop.permute.xlu0 %263
        %vm265 = vcmask 916480
        %v266 = vsel %vm265, %v258, %v260
        %v267 = vsel %vm265, %v262, %v264
        %v274 = vsel %vm265, %v260, %v258
        %v275 = vsel %vm265, %v264, %v262
        %276 = vst [vmem:[#allocation2 + $0x60] sm:$0xff] %v266
        %277 = vst [vmem:[#allocation2 + $0x68] sm:$0xff] %v274
        %278 = vst [vmem:[#allocation2 + $0x70] sm:$0xff] %v267
        %279 = vst [vmem:[#allocation2 + $0x78] sm:$0xff] %v275
        %280 = vrot.lane.b32.xlu0 %v199, 111
        %v281 = vpop.permute.xlu0 %280
        %282 = vrot.lane.b32.xlu0 %v200, 111
        %v283 = vpop.permute.xlu0 %282
        %284 = vrot.lane.b32.xlu0 %v201, 111
        %v285 = vpop.permute.xlu0 %284
        %286 = vrot.lane.b32.xlu0 %v202, 111
        %v287 = vpop.permute.xlu0 %286
        %vm288 = vcmask 908288
        %v289 = vsel %vm288, %v281, %v283
        %v290 = vsel %vm288, %v285, %v287
        %v297 = vsel %vm288, %v283, %v281
        %v298 = vsel %vm288, %v287, %v285
        %299 = vst [vmem:[#allocation2 + $0x80] sm:$0xff] %v289
        %300 = vst [vmem:[#allocation2 + $0x88] sm:$0xff] %v297
        %301 = vst [vmem:[#allocation2 + $0x90] sm:$0xff] %v290
        %302 = vst [vmem:[#allocation2 + $0x98] sm:$0xff] %v298
        %303 = vrot.lane.b32.xlu0 %v199, 110
        %v304 = vpop.permute.xlu0 %303
        %305 = vrot.lane.b32.xlu0 %v200, 110
        %v306 = vpop.permute.xlu0 %305
        %307 = vrot.lane.b32.xlu0 %v201, 110
        %v308 = vpop.permute.xlu0 %307
        %309 = vrot.lane.b32.xlu0 %v202, 110
        %v310 = vpop.permute.xlu0 %309
        %vm311 = vcmask 900096
        %v312 = vsel %vm311, %v304, %v306
        %v313 = vsel %vm311, %v308, %v310
        %v320 = vsel %vm311, %v306, %v304
        %v321 = vsel %vm311, %v310, %v308
        %322 = vst [vmem:[#allocation2 + $0xa0] sm:$0xff] %v312
        %323 = vst [vmem:[#allocation2 + $0xa8] sm:$0xff] %v320
        %324 = vst [vmem:[#allocation2 + $0xb0] sm:$0xff] %v313
        %325 = vst [vmem:[#allocation2 + $0xb8] sm:$0xff] %v321
        %326 = vrot.lane.b32.xlu0 %v199, 96
        %v327 = vpop.permute.xlu0 %326
        %328 = vrot.lane.b32.xlu0 %v200, 96
        %v329 = vpop.permute.xlu0 %328
        %330 = vrot.lane.b32.xlu0 %v201, 96
        %v331 = vpop.permute.xlu0 %330
        %332 = vrot.lane.b32.xlu0 %v202, 96
        %v333 = vpop.permute.xlu0 %332
        %vm334 = vcmask 785408
        %v335 = vsel %vm334, %v327, %v329
        %v336 = vsel %vm334, %v331, %v333
        %v343 = vsel %vm334, %v329, %v327
        %v344 = vsel %vm334, %v333, %v331
        %345 = vst [vmem:[#allocation2 + $0xc0] sm:$0xff] %v335
        %346 = vst [vmem:[#allocation2 + $0xc8] sm:$0xff] %v343
        %347 = vst [vmem:[#allocation2 + $0xd0] sm:$0xff] %v336
        %348 = vst [vmem:[#allocation2 + $0xd8] sm:$0xff] %v344
        %349 = vrot.lane.b32.xlu0 %v199, 95
        %v350 = vpop.permute.xlu0 %349
        %351 = vrot.lane.b32.xlu0 %v200, 95
        %v352 = vpop.permute.xlu0 %351
        %353 = vrot.lane.b32.xlu0 %v201, 95
        %v354 = vpop.permute.xlu0 %353
        %355 = vrot.lane.b32.xlu0 %v202, 95
        %v356 = vpop.permute.xlu0 %355
        %vm357 = vcmask 777216
        %v358 = vsel %vm357, %v350, %v352
        %v359 = vsel %vm357, %v354, %v356
        %v366 = vsel %vm357, %v352, %v350
        %v367 = vsel %vm357, %v356, %v354
        %368 = vst [vmem:[#allocation2 + $0xe0] sm:$0xff] %v358
        %369 = vst [vmem:[#allocation2 + $0xe8] sm:$0xff] %v366
        %370 = vst [vmem:[#allocation2 + $0xf0] sm:$0xff] %v359
        %371 = vst [vmem:[#allocation2 + $0xf8] sm:$0xff] %v367
        %372 = vrot.lane.b32.xlu0 %v199, 94
        %v373 = vpop.permute.xlu0 %372
        %374 = vrot.lane.b32.xlu0 %v200, 94
        %v375 = vpop.permute.xlu0 %374
        %376 = vrot.lane.b32.xlu0 %v201, 94
        %v377 = vpop.permute.xlu0 %376
        %378 = vrot.lane.b32.xlu0 %v202, 94
        %v379 = vpop.permute.xlu0 %378
        %vm380 = vcmask 769024
        %v381 = vsel %vm380, %v373, %v375
        %v382 = vsel %vm380, %v377, %v379
        %v389 = vsel %vm380, %v375, %v373
        %v390 = vsel %vm380, %v379, %v377
        %391 = vst [vmem:[#allocation2 + $0x100] sm:$0xff] %v381
        %392 = vst [vmem:[#allocation2 + $0x108] sm:$0xff] %v389
        %393 = vst [vmem:[#allocation2 + $0x110] sm:$0xff] %v382
        %394 = vst [vmem:[#allocation2 + $0x118] sm:$0xff] %v390
        %v395 = vld [vmem:[%s1] sm:$0xff]
        %v396 = vld [vmem:[%s1 + $0x8] sm:$0xff]
        %v397 = vld [vmem:[%s1 + $0x10] sm:$0xff]
        %v398 = vld [vmem:[%s1 + $0x18] sm:$0xff]
        %v399 = vld [vmem:[%s1 + $0x20] sm:$0xff]
        %v400 = vld [vmem:[%s1 + $0x28] sm:$0xff]
        %v401 = vld [vmem:[%s1 + $0x30] sm:$0xff]
        %v402 = vld [vmem:[%s1 + $0x38] sm:$0xff]
        %v403 = vld [vmem:[#allocation2] sm:$0xff]
        %v404 = vld [vmem:[#allocation2 + $0x8] sm:$0xff]
        %v405 = vld [vmem:[#allocation2 + $0x10] sm:$0xff]
        %v406 = vld [vmem:[#allocation2 + $0x18] sm:$0xff]
        %v407 = vld [vmem:[#allocation2 + $0x20] sm:$0xff]
        %v408 = vld [vmem:[#allocation2 + $0x28] sm:$0xff]
        %v409 = vld [vmem:[#allocation2 + $0x30] sm:$0xff]
        %v410 = vld [vmem:[#allocation2 + $0x38] sm:$0xff]
        %v411 = vld [vmem:[#allocation2 + $0x40] sm:$0xff]
        %v412 = vld [vmem:[#allocation2 + $0x48] sm:$0xff]
        %v413 = vld [vmem:[#allocation2 + $0x50] sm:$0xff]
        %v414 = vld [vmem:[#allocation2 + $0x58] sm:$0xff]
        %v415 = vld [vmem:[#allocation2 + $0x60] sm:$0xff]
        %v416 = vld [vmem:[#allocation2 + $0x68] sm:$0xff]
        %v417 = vld [vmem:[#allocation2 + $0x70] sm:$0xff]
        %v418 = vld [vmem:[#allocation2 + $0x78] sm:$0xff]
        %v419 = vld [vmem:[#allocation2 + $0x80] sm:$0xff]
        %v420 = vld [vmem:[#allocation2 + $0x88] sm:$0xff]
        %v421 = vld [vmem:[#allocation2 + $0x90] sm:$0xff]
        %v422 = vld [vmem:[#allocation2 + $0x98] sm:$0xff]
        %v423 = vld [vmem:[#allocation2 + $0xa0] sm:$0xff]
        %v424 = vld [vmem:[#allocation2 + $0xa8] sm:$0xff]
        %v425 = vld [vmem:[#allocation2 + $0xb0] sm:$0xff]
        %v426 = vld [vmem:[#allocation2 + $0xb8] sm:$0xff]
        %v427 = vld [vmem:[#allocation2 + $0xc0] sm:$0xff]
        %v428 = vld [vmem:[#allocation2 + $0xc8] sm:$0xff]
        %v429 = vld [vmem:[#allocation2 + $0xd0] sm:$0xff]
        %v430 = vld [vmem:[#allocation2 + $0xd8] sm:$0xff]
        %v431 = vld [vmem:[#allocation2 + $0xe0] sm:$0xff]
        %v432 = vld [vmem:[#allocation2 + $0xe8] sm:$0xff]
        %v433 = vld [vmem:[#allocation2 + $0xf0] sm:$0xff]
        %v434 = vld [vmem:[#allocation2 + $0xf8] sm:$0xff]
        %v435 = vld [vmem:[#allocation2 + $0x100] sm:$0xff]
        %v436 = vld [vmem:[#allocation2 + $0x108] sm:$0xff]
        %v437 = vld [vmem:[#allocation2 + $0x110] sm:$0xff]
        %v438 = vld [vmem:[#allocation2 + $0x118] sm:$0xff]
        %vm439 = vcmask 130048
        %v441 = vsel %vm439, %v396, 0
        %v444 = vsel %vm439, %v398, 0
        %v447 = vsel %vm439, %v400, 0
        %v450 = vsel %vm439, %v402, 0
        %452 = vmatprep.subr.mxu0 %v404
        %453 = vmatpush1.msra.mxu0 %v403
        %454 = vmatprep.subr.mxu0 %v406
        %455 = vmatpush1.msra.mxu0 %v405
        %456 = vmatprep.subr.mxu0 %v408
        %457 = vmatpush1.msra.mxu0 %v407
        %458 = vmatprep.subr.mxu0 %v410
        %459 = vmatpush1.msra.mxu0 %v409
        %460 = vmatprep.subr.mxu0 %v412
        %461 = vmatpush1.msra.mxu0 %v411
        %462 = vmatprep.subr.mxu0 %v414
        %463 = vmatpush1.msra.mxu0 %v413
        %464 = vmatprep.subr.mxu0 %v416
        %465 = vmatpush1.msra.mxu0 %v415
        %466 = vmatprep.subr.mxu0 %v418
        %467 = vmatpush1.msra.mxu0 %v417
        %468 = vmatprep.subr.mxu0 %v420
        %469 = vmatpush1.msra.mxu0 %v419
        %470 = vmatprep.subr.mxu0 %v422
        %471 = vmatpush1.msra.mxu0 %v421
        %472 = vmatprep.subr.mxu0 %v424
        %473 = vmatpush1.msra.mxu0 %v423
        %474 = vmatprep.subr.mxu0 %v426
        %475 = vmatpush1.msra.mxu0 %v425
        %476 = vmatprep.subr.mxu0 %v428
        %477 = vmatpush1.msra.mxu0 %v427
        %478 = vmatprep.subr.mxu0 %v430
        %479 = vmatpush1.msra.mxu0 %v429
        %480 = vmatprep.subr.mxu0 %v432
        %481 = vmatpush1.msra.mxu0 %v431
        %482 = vmatprep.subr.mxu0 %v434
        %483 = vmatpush1.msra.mxu0 %v433
        %484 = vmatprep.subr.mxu0 %v436
        %485 = vmatpush1.msra.mxu0 %v435
        %486 = vmatprep.subr.mxu0 %v438
        %487 = vmatpush1.msra.mxu0 %v437
        %488 = vmatprep.subr.mxu0 0.0
        %489 = vmatpush1.msra.mxu0 0.0
        %490 = vmatprep.subr.mxu0 0.0
        %491 = vmatpush1.msra.mxu0 0.0
        %492 = vmatprep.subr.mxu0 0.0
        %493 = vmatpush1.msra.mxu0 0.0
        %494 = vmatprep.subr.mxu0 0.0
        %495 = vmatpush1.msra.mxu0 0.0
        %496 = vmatprep.subr.mxu0 0.0
        %497 = vmatpush1.msra.mxu0 0.0
        %498 = vmatprep.subr.mxu0 0.0
        %499 = vmatpush1.msra.mxu0 0.0
        %500 = vmatprep.subr.mxu0 0.0
        %501 = vmatpush1.msra.mxu0 0.0
        %502 = vmatprep.subr.mxu0 0.0
        %503 = vmatpush1.msra.mxu0 0.0
        %504 = vmatprep.subr.mxu0 0.0
        %505 = vmatpush1.msra.mxu0 0.0
        %506 = vmatprep.subr.mxu0 0.0
        %507 = vmatpush1.msra.mxu0 0.0
        %508 = vmatprep.subr.mxu0 0.0
        %509 = vmatpush1.msra.mxu0 0.0
        %510 = vmatprep.subr.mxu0 0.0
        %511 = vmatpush1.msra.mxu0 0.0
        %512 = vmatprep.subr.mxu0 0.0
        %513 = vmatpush1.msra.mxu0 0.0
        %514 = vmatprep.subr.mxu0 0.0
        %515 = vmatpush1.msra.mxu0 0.0
        %516 = vmatprep.mubr.f32.mxu0 %v441
        %517 = vmatmul.mubr.f32.gmra.mrb[0].mxu0 %v395
        %v518 = vpop.f32.mrb[0].mxu0
        %v519 = vadd.f32 0.0, %v518
        %v520 = vpop.f32.mrb[0].mxu0
        %v521 = vadd.f32 0.0, %v520
        %522 = vmatprep.mubr.f32.mxu0 %v444
        %523 = vmatmul.mubr.f32.gmra.mrb[0].mxu0 %v397
        %v524 = vpop.f32.mrb[0].mxu0
        %v525 = vadd.f32 0.0, %v524
        %v526 = vpop.f32.mrb[0].mxu0
        %v527 = vadd.f32 0.0, %v526
        %528 = vmatprep.mubr.f32.mxu0 %v447
        %529 = vmatmul.mubr.f32.gmra.mrb[0].mxu0 %v399
        %v530 = vpop.f32.mrb[0].mxu0
        %v531 = vadd.f32 0.0, %v530
        %v532 = vpop.f32.mrb[0].mxu0
        %v533 = vadd.f32 0.0, %v532
        %534 = vmatprep.mubr.f32.mxu0 %v450
        %535 = vmatmul.mubr.f32.gmra.mrb[0].mxu0 %v401
        %v536 = vpop.f32.mrb[0].mxu0
        %v537 = vadd.f32 0.0, %v536
        %v538 = vpop.f32.mrb[0].mxu0
        %v539 = vadd.f32 0.0, %v538
        %540 = vdwg.mxu0
        %v541 = vmax.f32 %v519, %v525
        %v542 = vmax.f32 %v521, %v527
        %v543 = vmax.f32 %v531, %v537
        %v544 = vmax.f32 %v533, %v539
        %v545 = vmax.f32 %v541, %v543
        %v546 = vmax.f32 %v542, %v544
        %v547 = vld [vmem:[%s2] sm:$0xff]
        %549 = vset.pattern.permute.xlu0 0
        %550 = vperm.xlu0 %549, %v547
        %v551 = vpop.permute.xlu0 %550
        %v553 = vadd.f32 %v545, %v551
        %v554 = vadd.f32 %v546, %v551
        %v555 = vmax.f32 %v553, 0.0
        %v556 = vmax.f32 %v554, 0.0
        %557 = vst [vmem:[%s197] sm:$0xff] %v555
        %558 = vst [vmem:[%s197 + $0x8] sm:$0xff] %v556
        %s559 = smul.u32 2, %s14
        %p560 = scmp.lt.s32.totalorder %s559, 3
        %s561 = scalar_select %p560, %s559, 3
        %s562 = smul.addr %s561, 8
        %s563 = scalar_lea.vmem %s3, %s562
        // Predicated region
        $region56: #{net_forward.3} parent=50 // pred_check
          %p564 = pneg %p100
        $region57: #{net_forward.3} parent=50 // pred_check_branch
          %566 = sbr.rel (%p564) target = $region59
        $region58: #{net_forward.3} parent=50 // pred_region
          %s567 = smul.u32 2, %s14
        $region59: #{net_forward.3} parent=50 // pred_fallthru
          _
      $region51: #{net_forward.3} parent=5 // pred_fallthru
        _
      %p568 = scmp.le.s32.totalorder 2, %s9
      // Predicated region
      $region60: #{net_forward.3} parent=5 // pred_check
        %p569 = pneg %p568
      $region61: #{net_forward.3} parent=5 // pred_check_branch
        %571 = sbr.rel (%p569) target = $region63
      $region62: #{net_forward.3} parent=5 // pred_region
        %s572 = ssub.s32 %s9, 2
        // Predicated region
        $region64: #{net_forward.3} parent=62 // pred_check
          %p573 = pneg %p106
        $region65: #{net_forward.3} parent=62 // pred_check_branch
          %575 = sbr.rel (%p573) target = $region67
        $region66: #{net_forward.3} parent=62 // pred_region
          %s576 = smul.u32 2, %s15
          %p577 = scmp.lt.s32.totalorder %s576, 3
          %s578 = scalar_select %p577, %s576, 3
          %s579 = smul.addr %s578, 8
          %s580 = scalar_lea.vmem %s3, %s579
        $region67: #{net_forward.3} parent=62 // pred_fallthru
          _
      $region63: #{net_forward.3} parent=5 // pred_fallthru
        _
    $region6: #{net_forward.3} parent=1 // loop_footer
      %s13 = sadd.s32 1, %s9
    $region7: #{net_forward.3} parent=1 // loop_footer_branch
      %8 = sbr.rel target = $region3
    $region8: #{net_forward.3} parent=1 // loop_exit
      _

// kernel: net_forward.4
$region0: #{net_forward.4}
  #allocation0 [shape = 'u32[]', space=smem, size = 0x4, offset = 0x4, fixed_abs, tag = 'smem constant byte address 0x4 - core index']
  #allocation1 [shape = 'u32[144,128]{1,0:T(1,128)}', space=vmem, size = 0x12000, scoped, tag = 'internal scratch']
  #allocation2 [shape = 'f32[288,128]{1,0:T(8,128)}', space=vmem, size = 0x24000, scoped, tag = 'scratch operand']
  %s0 = inlined_call_operand.vmem [shape: f32[32,256], index: 0, kind: input, shape index: {}]
  %s1 = inlined_call_operand.vmem [shape: f32[64,288], index: 1, kind: input, shape index: {}]
  %s2 = inlined_call_operand.vmem [shape: f32[16,1], index: 2, kind: input, shape index: {}]
  %s3 = inlined_call_operand.vmem [shape: f32[16,256], index: 3, kind: output, shape index: {}]
  %s4 = sld [smem:[#allocation0]]
  $region117: #{net_forward.4} parent=0
    _
  %s6 = ssub.s32 1, %s4
  %s7 = scalar_select 0, %s6, %s4
  $region1: #{net_forward.4} parent=0
    #allocation3 [shape = 'u8[32768]{0}', space=vmem, size = 0x8000, scoped, tag = 'input window, operand 0']
    #allocation4 [shape = 'u8[16384]{0}', space=vmem, size = 0x4000, scoped, tag = 'output window, operand 0']
    loop: start=0, step=1, limit=4
    $region2: #{net_forward.4} parent=1 // loop_pre_header
      _
    $region3: #{net_forward.4} parent=1 // loop_header
      %s9 = sphi 0, %s13
      %p10 = scmp.ge.s32.totalorder %s9, 4
      %s19 = sphi 0, %s21
      %s22 = sphi 0, %s19
      %s23 = sphi 0, %s22
      %s39 = sphi 0, %s23
      %s43 = sphi 0, %s43
      %s45 = sphi 0, %s43
      %s46 = sphi 0, %s45
      %s60 = sphi 0, %s46
      %s64 = sphi 0, %s64
      %s66 = sphi 0, %s64
      %s67 = sphi 0, %s66
      %s81 = sphi 0, %s67
      %s87 = sphi 0, %s89
      %s90 = sphi 0, %s87
      %s91 = sphi 0, %s90
      %s107 = sphi 0, %s91
    $region4: #{net_forward.4} parent=1 // loop_header_branch
      %12 = sbr.rel (%p10) target = $region8
    $region5: #{net_forward.4} parent=1 // loop_body
      %s14 = ssub.s32 %s9, 1
      %s15 = ssub.s32 %s9, 2
      %s16 = sadd.s32 %s9, 1
      %s17 = ssub.s32 %s9, %s16
      %p18 = scmp.eq.s32.totalorder %s17, 0
      %s20 = sadd.s32 %s19, 1
      %s21 = scalar_select %p18, %s19, %s20
      %p24 = pneg %p18
      %p25 = scmp.eq.s32.totalorder %s9, 1
      %p26 = por %p24, %p25
      %p27 = scmp.ne.s32.totalorder %s19, %s22
      %p28 = scmp.eq.s32.totalorder %s9, 0
      %p29 = por %p27, %p28
      %p30 = scmp.ne.s32.totalorder %s19, %s22
      %p31 = scmp.eq.s32.totalorder %s14, 1
      %p32 = por %p30, %p31
      %p33 = scmp.ne.s32.totalorder %s22, %s23
      %p34 = scmp.eq.s32.totalorder %s14, 0
      %p35 = por %p33, %p34
      %p36 = scmp.ne.s32.totalorder %s22, %s23
      %p37 = scmp.eq.s32.totalorder %s15, 1
      %p38 = por %p36, %p37
      %p40 = scmp.ne.s32.totalorder %s23, %s39
      %p41 = scmp.eq.s32.totalorder %s15, 0
      %p42 = por %p40, %p41
      %s44 = sadd.s32 %s43, 1
      %p47 = scmp.eq.s32.totalorder %s9, 1
      %p48 = scmp.ne.s32.totalorder %s43, %s45
      %p49 = scmp.eq.s32.totalorder %s9, 0
      %p50 = por %p48, %p49
      %p51 = scmp.ne.s32.totalorder %s43, %s45
      %p52 = scmp.eq.s32.totalorder %s14, 1
      %p53 = por %p51, %p52
      %p54 = scmp.ne.s32.totalorder %s45, %s46
      %p55 = scmp.eq.s32.totalorder %s14, 0
      %p56 = por %p54, %p55
      %p57 = scmp.ne.s32.totalorder %s45, %s46
      %p58 = scmp.eq.s32.totalorder %s15, 1
      %p59 = por %p57, %p58
      %p61 = scmp.ne.s32.totalorder %s46, %s60
      %p62 = scmp.eq.s32.totalorder %s15, 0
      %p63 = por %p61, %p62
      %s65 = sadd.s32 %s64, 1
      %p68 = scmp.eq.s32.totalorder %s9, 1
      %p69 = scmp.ne.s32.totalorder %s64, %s66
      %p70 = scmp.eq.s32.totalorder %s9, 0
      %p71 = por %p69, %p70
      %p72 = scmp.ne.s32.totalorder %s64, %s66
      %p73 = scmp.eq.s32.totalorder %s14, 1
      %p74 = por %p72, %p73
      %p75 = scmp.ne.s32.totalorder %s66, %s67
      %p76 = scmp.eq.s32.totalorder %s14, 0
      %p77 = por %p75, %p76
      %p78 = scmp.ne.s32.totalorder %s66, %s67
      %p79 = scmp.eq.s32.totalorder %s15, 1
      %p80 = por %p78, %p79
      %p82 = scmp.ne.s32.totalorder %s67, %s81
      %p83 = scmp.eq.s32.totalorder %s15, 0
      %p84 = por %p82, %p83
      %s85 = ssub.s32 %s9, %s16
      %p86 = scmp.eq.s32.totalorder %s85, 0
      %s88 = sadd.s32 %s87, 1
      %s89 = scalar_select %p86, %s87, %s88
      %p92 = pneg %p86
      %p93 = scmp.eq.s32.totalorder %s9, 1
      %p94 = por %p92, %p93
      %p95 = scmp.ne.s32.totalorder %s87, %s90
      %p96 = scmp.eq.s32.totalorder %s9, 0
      %p97 = por %p95, %p96
      %p98 = scmp.ne.s32.totalorder %s87, %s90
      %p99 = scmp.eq.s32.totalorder %s14, 1
      %p100 = por %p98, %p99
      %p101 = scmp.ne.s32.totalorder %s90, %s91
      %p102 = scmp.eq.s32.totalorder %s14, 0
      %p103 = por %p101, %p102
      %p104 = scmp.ne.s32.totalorder %s90, %s91
      %p105 = scmp.eq.s32.totalorder %s15, 1
      %p106 = por %p104, %p105
      %p108 = scmp.ne.s32.totalorder %s91, %s107
      %p109 = scmp.eq.s32.totalorder %s15, 0
      %p110 = por %p108, %p109
      %p111 = scmp.le.s32.totalorder 1, %s9
      %p112 = scmp.lt.s32.totalorder %s9, 3
      %p113 = pnand %p111, %p112
      %p114 = pneg %p113
      // Predicated region
      $region9: #{net_forward.4} parent=5 // pred_check
        _
      $region10: #{net_forward.4} parent=5 // pred_check_branch
        %116 = sbr.rel (%p113) target = $region12
      $region11: #{net_forward.4} parent=5 // pred_region
        %s117 = ssub.s32 %s9, 1
        // Predicated region
        $region13: #{net_forward.4} parent=11 // pred_check
          %p118 = pneg %p56
        $region14: #{net_forward.4} parent=11 // pred_check_branch
          %120 = sbr.rel (%p118) target = $region16
        $region15: #{net_forward.4} parent=11 // pred_region
          _
        $region16: #{net_forward.4} parent=11 // pred_fallthru
          _
        // Predicated region
        $region17: #{net_forward.4} parent=11 // pred_check
          %p121 = pneg %p77
        $region18: #{net_forward.4} parent=11 // pred_check_branch
          %123 = sbr.rel (%p121) target = $region20
        $region19: #{net_forward.4} parent=11 // pred_region
          _
        $region20: #{net_forward.4} parent=11 // pred_fallthru
          _
      $region12: #{net_forward.4} parent=5 // pred_fallthru
        _
      %p124 = scmp.lt.s32.totalorder %s9, 2
      // Predicated region
      $region21: #{net_forward.4} parent=5 // pred_check
        %p125 = pneg %p124
      $region22: #{net_forward.4} parent=5 // pred_check_branch
        %127 = sbr.rel (%p125) target = $region24
      $region23: #{net_forward.4} parent=5 // pred_region
        // Predicated region
        $region25: #{net_forward.4} parent=23 // pred_check
          %p128 = pneg %p29
        $region26: #{net_forward.4} parent=23 // pred_check_branch
          %130 = sbr.rel (%p128) target = $region28
        $region27: #{net_forward.4} parent=23 // pred_region
          %s131 = sand.u32 %s19, 1
          %s132 = sand.u32 %s19, 1
          %s133 = smul.addr %s132, 32
          %s134 = scalar_lea.vmem [#allocation3], %s133
          %s135 = smul.addr %s9, 8
          %s136 = scalar_lea.vmem %s0, %s135
          // Predicated region
          $region29: #{net_forward.4} parent=27 // pred_check
            _
          $region30: #{net_forward.4} parent=27 // pred_check_branch
            %138 = sbr.rel (0) target = $region32
          $region31: #{net_forward.4} parent=27 // pred_region
            // Predicated region
            $region33: #{net_forward.4} parent=31 // pred_check
              _
            $region34: #{net_forward.4} parent=31 // pred_check_branch
              %140 = sbr.rel (0) target = $region36
            $region35: #{net_forward.4} parent=31 // pred_region
              // Predicated region
              $region48: #{net_forward.4} parent=35 // pred_check
                _
              $region49: #{net_forward.4} parent=35 // pred_check_branch
                %161 = sbr.rel (0) target = $region51
              $region50: #{net_forward.4} parent=35 // pred_region
                loop: start=0, step=1, limit=1
                $region52: #{net_forward.4} parent=50 // loop_pre_header
                  _
                $region53: #{net_forward.4} parent=50 // loop_header
                  %s163 = sphi 0, %s167
                  %p164 = scmp.ge.s32.totalorder %s163, 1
                  %s168 = sphi %s136, %s136
                  %s169 = sphi %s134, %s134
                $region54: #{net_forward.4} parent=50 // loop_header_branch
                  %166 = sbr.rel (%p164) target = $region58
                $region55: #{net_forward.4} parent=50 // loop_body
                  %v170 = vld [vmem:[%s168] sm:$0xff]
                  %171 = vst [vmem:[%s169] sm:$0xff] %v170
                  %v172 = vld [vmem:[%s168 + $0x10] sm:$0xff]
                  %173 = vst [vmem:[%s169 + $0x8] sm:$0xff] %v172
                  %v174 = vld [vmem:[%s168 + $0x20] sm:$0xff]
                  %175 = vst [vmem:[%s169 + $0x10] sm:$0xff] %v174
                  %v176 = vld [vmem:[%s168 + $0x30] sm:$0xff]
                  %177 = vst [vmem:[%s169 + $0x18] sm:$0xff] %v176
                $region56: #{net_forward.4} parent=50 // loop_footer
                  %s167 = sadd.s32 1, %s163
                $region57: #{net_forward.4} parent=50 // loop_footer_branch
                  %162 = sbr.rel target = $region53
                $region58: #{net_forward.4} parent=50 // loop_exit
                  _
              $region51: #{net_forward.4} parent=35 // pred_fallthru
                _
              // Predicated region
              $region59: #{net_forward.4} parent=35 // pred_check
                _
              $region60: #{net_forward.4} parent=35 // pred_check_branch
                %179 = sbr.rel target = $region62
              $region61: #{net_forward.4} parent=35 // pred_region
                _
              $region62: #{net_forward.4} parent=35 // pred_fallthru
                _
            $region36: #{net_forward.4} parent=31 // pred_fallthru
              _
            // Predicated region
            $region37: #{net_forward.4} parent=31 // pred_check
              _
            $region38: #{net_forward.4} parent=31 // pred_check_branch
              %142 = sbr.rel target = $region40
            $region39: #{net_forward.4} parent=31 // pred_region
              loop: start=0, step=1, limit=1
              $region41: #{net_forward.4} parent=39 // loop_pre_header
                _
              $region42: #{net_forward.4} parent=39 // loop_header
                %s145 = sphi 0, %s149
                %p146 = scmp.ge.s32.totalorder %s145, 1
                %s150 = sphi %s136, %s136
                %s151 = sphi %s134, %s134
              $region43: #{net_forward.4} parent=39 // loop_header_branch
                %148 = sbr.rel (%p146) target = $region47
              $region44: #{net_forward.4} parent=39 // loop_body
                %v152 = vld [vmem:[%s150] sm:$0xff]
                %153 = vst [vmem:[%s151] sm:$0xff] %v152
                %v154 = vld [vmem:[%s150 + $0x10] sm:$0xff]
                %155 = vst [vmem:[%s151 + $0x8] sm:$0xff] %v154
                %v156 = vld [vmem:[%s150 + $0x20] sm:$0xff]
                %157 = vst [vmem:[%s151 + $0x10] sm:$0xff] %v156
                %v158 = vld [vmem:[%s150 + $0x30] sm:$0xff]
                %159 = vst [vmem:[%s151 + $0x18] sm:$0xff] %v158
              $region45: #{net_forward.4} parent=39 // loop_footer
                %s149 = sadd.s32 1, %s145
              $region46: #{net_forward.4} parent=39 // loop_footer_branch
                %144 = sbr.rel target = $region42
              $region47: #{net_forward.4} parent=39 // loop_exit
                _
            $region40: #{net_forward.4} parent=31 // pred_fallthru
              _
          $region32: #{net_forward.4} parent=27 // pred_fallthru
            _
          %180 = vnop
        $region28: #{net_forward.4} parent=23 // pred_fallthru
          _
      $region24: #{net_forward.4} parent=5 // pred_fallthru
        _
      %p181 = scmp.le.s32.totalorder 1, %s9
      %p182 = scmp.lt.s32.totalorder %s9, 3
      %p183 = pnand %p181, %p182
      %p184 = pneg %p183
      // Predicated region
      $region63: #{net_forward.4} parent=5 // pred_check
        _
      $region64: #{net_forward.4} parent=5 // pred_check_branch
        %186 = sbr.rel (%p183) target = $region66
      $region65: #{net_forward.4} parent=5 // pred_region
        %s187 = ssub.s32 %s9, 1
        %s188 = sand.u32 %s22, 1
        %s189 = sand.u32 %s22, 1
        %s190 = smul.addr %s189, 32
        %s191 = scalar_lea.vmem [#allocation3], %s190
        // Predicated region
        $region67: #{net_forward.4} parent=65 // pred_check
          %p192 = pneg %p35
        $region68: #{net_forward.4} parent=65 // pred_check_branch
          %194 = sbr.rel (%p192) target = $region70
        $region69: #{net_forward.4} parent=65 // pred_region
          _
        $region70: #{net_forward.4} parent=65 // pred_fallthru
          _
        %s195 = sand.u32 %s22, 1
        %s196 = sand.u32 %s22, 1
        %s197 = smul.addr %s196, 32
        %s198 = scalar_lea.vmem [#allocation3], %s197
        %p199 = pneg %p35
        %p200 = pneg %p32
        %p201 = pneg %p56
        %p202 = pneg %p53
        %p203 = pneg %p77
        %p204 = pneg %p74
        %p205 = pneg %p103
        %p206 = pneg %p100
        %s207 = sand.u32 %s90, 1
        %s208 = sand.u32 %s90, 1
        %s209 = smul.addr %s208, 16
        %s210 = scalar_lea.vmem [#allocation4], %s209
        %v211 = vld [vmem:[%s191] sm:$0xff]
        %v212 = vld [vmem:[%s191 + $0x8] sm:$0xff]
        %v213 = vld [vmem:[%s191 + $0x10] sm:$0xff]
        %v214 = vld [vmem:[%s191 + $0x18] sm:$0xff]
        %215 = vst [vmem:[#allocation2] sm:$0xff] %v211
        %216 = vst [vmem:[#allocation2 + $0x8] sm:$0xff] %v212
        %217 = vst [vmem:[#allocation2 + $0x10] sm:$0xff] %v213
        %218 = vst [vmem:[#allocation2 + $0x18] sm:$0xff] %v214
        %223 = vrot.lane.b32.xlu0 %v211, 127
        %v224 = vpop.permute.xlu0 %223
        %225 = vrot.lane.b32.xlu0 %v212, 127
        %v226 = vpop.permute.xlu0 %225
        %227 = vrot.lane.b32.xlu0 %v213, 127
        %v228 = vpop.permute.xlu0 %227
        %229 = vrot.lane.b32.xlu0 %v214, 127
        %v230 = vpop.permute.xlu0 %229
        %235 = vst [vmem:[#allocation2 + $0x20] sm:$0xff] %v224
        %236 = vst [vmem:[#allocation2 + $0x28] sm:$0xff] %v226
        %237 = vst [vmem:[#allocation2 + $0x30] sm:$0xff] %v228
        %238 = vst [vmem:[#allocation2 + $0x38] sm:$0xff] %v230
        %239 = vrot.lane.b32.xlu0 %v211, 126
        %v240 = vpop.permute.xlu0 %239
        %241 = vrot.lane.b32.xlu0 %v212, 126
        %v242 = vpop.permute.xlu0 %241
        %243 = vrot.lane.b32.xlu0 %v213, 126
        %v244 = vpop.permute.xlu0 %243
        %245 = vrot.lane.b32.xlu0 %v214, 126
        %v246 = vpop.permute.xlu0 %245
        %251 = vst [vmem:[#allocation2 + $0x40] sm:$0xff] %v240
        %252 = vst [vmem:[#allocation2 + $0x48] sm:$0xff] %v242
        %253 = vst [vmem:[#allocation2 + $0x50] sm:$0xff] %v244
        %254 = vst [vmem:[#allocation2 + $0x58] sm:$0xff] %v246
        %255 = vrot.lane.b32.xlu0 %v211, 112
        %v256 = vpop.permute.xlu0 %255
        %257 = vrot.lane.b32.xlu0 %v212, 112
        %v258 = vpop.permute.xlu0 %257
        %259 = vrot.lane.b32.xlu0 %v213, 112
        %v260 = vpop.permute.xlu0 %259
        %261 = vrot.lane.b32.xlu0 %v214, 112
        %v262 = vpop.permute.xlu0 %261
        %267 = vst [vmem:[#allocation2 + $0x60] sm:$0xff] %v256
        %268 = vst [vmem:[#allocation2 + $0x68] sm:$0xff] %v258
        %269 = vst [vmem:[#allocation2 + $0x70] sm:$0xff] %v260
        %270 = vst [vmem:[#allocation2 + $0x78] sm:$0xff] %v262
        %271 = vrot.lane.b32.xlu0 %v211, 111
        %v272 = vpop.permute.xlu0 %271
        %273 = vrot.lane.b32.xlu0 %v212, 111
        %v274 = vpop.permute.xlu0 %273
        %275 = vrot.lane.b32.xlu0 %v213, 111
        %v276 = vpop.permute.xlu0 %275
        %277 = vrot.lane.b32.xlu0 %v214, 111
        %v278 = vpop.permute.xlu0 %277
        %283 = vst [vmem:[#allocation2 + $0x80] sm:$0xff] %v272
        %284 = vst [vmem:[#allocation2 + $0x88] sm:$0xff] %v274
        %285 = vst [vmem:[#allocation2 + $0x90] sm:$0xff] %v276
        %286 = vst [vmem:[#allocation2 + $0x98] sm:$0xff] %v278
        %287 = vrot.lane.b32.xlu0 %v211, 110
        %v288 = vpop.permute.xlu0 %287
        %289 = vrot.lane.b32.xlu0 %v212, 110
        %v290 = vpop.permute.xlu0 %289
        %291 = vrot.lane.b32.xlu0 %v213, 110
        %v292 = vpop.permute.xlu0 %291
        %293 = vrot.lane.b32.xlu0 %v214, 110
        %v294 = vpop.permute.xlu0 %293
        %299 = vst [vmem:[#allocation2 + $0xa0] sm:$0xff] %v288
        %300 = vst [vmem:[#allocation2 + $0xa8] sm:$0xff] %v290
        %301 = vst [vmem:[#allocation2 + $0xb0] sm:$0xff] %v292
        %302 = vst [vmem:[#allocation2 + $0xb8] sm:$0xff] %v294
        %303 = vrot.lane.b32.xlu0 %v211, 96
        %v304 = vpop.permute.xlu0 %303
        %305 = vrot.lane.b32.xlu0 %v212, 96
        %v306 = vpop.permute.xlu0 %305
        %307 = vrot.lane.b32.xlu0 %v213, 96
        %v308 = vpop.permute.xlu0 %307
        %309 = vrot.lane.b32.xlu0 %v214, 96
        %v310 = vpop.permute.xlu0 %309
        %315 = vst [vmem:[#allocation2 + $0xc0] sm:$0xff] %v304
        %316 = vst [vmem:[#allocation2 + $0xc8] sm:$0xff] %v306
        %317 = vst [vmem:[#allocation2 + $0xd0] sm:$0xff] %v308
        %318 = vst [vmem:[#allocation2 + $0xd8] sm:$0xff] %v310
        %319 = vrot.lane.b32.xlu0 %v211, 95
        %v320 = vpop.permute.xlu0 %319
        %321 = vrot.lane.b32.xlu0 %v212, 95
        %v322 = vpop.permute.xlu0 %321
        %323 = vrot.lane.b32.xlu0 %v213, 95
        %v324 = vpop.permute.xlu0 %323
        %325 = vrot.lane.b32.xlu0 %v214, 95
        %v326 = vpop.permute.xlu0 %325
        %331 = vst [vmem:[#allocation2 + $0xe0] sm:$0xff] %v320
        %332 = vst [vmem:[#allocation2 + $0xe8] sm:$0xff] %v322
        %333 = vst [vmem:[#allocation2 + $0xf0] sm:$0xff] %v324
        %334 = vst [vmem:[#allocation2 + $0xf8] sm:$0xff] %v326
        %335 = vrot.lane.b32.xlu0 %v211, 94
        %v336 = vpop.permute.xlu0 %335
        %337 = vrot.lane.b32.xlu0 %v212, 94
        %v338 = vpop.permute.xlu0 %337
        %339 = vrot.lane.b32.xlu0 %v213, 94
        %v340 = vpop.permute.xlu0 %339
        %341 = vrot.lane.b32.xlu0 %v214, 94
        %v342 = vpop.permute.xlu0 %341
        %347 = vst [vmem:[#allocation2 + $0x100] sm:$0xff] %v336
        %348 = vst [vmem:[#allocation2 + $0x108] sm:$0xff] %v338
        %349 = vst [vmem:[#allocation2 + $0x110] sm:$0xff] %v340
        %350 = vst [vmem:[#allocation2 + $0x118] sm:$0xff] %v342
        %v351 = vld [vmem:[%s1] sm:$0xff]
        %v352 = vld [vmem:[%s1 + $0x8] sm:$0xff]
        %v353 = vld [vmem:[%s1 + $0x10] sm:$0xff]
        %v354 = vld [vmem:[%s1 + $0x18] sm:$0xff]
        %v355 = vld [vmem:[%s1 + $0x20] sm:$0xff]
        %v356 = vld [vmem:[%s1 + $0x28] sm:$0xff]
        %v357 = vld [vmem:[%s1 + $0x30] sm:$0xff]
        %v358 = vld [vmem:[%s1 + $0x38] sm:$0xff]
        %v359 = vld [vmem:[%s1 + $0x40] sm:$0xff]
        %v360 = vld [vmem:[%s1 + $0x48] sm:$0xff]
        %v361 = vld [vmem:[%s1 + $0x50] sm:$0xff]
        %v362 = vld [vmem:[%s1 + $0x58] sm:$0xff]
        %v363 = vld [vmem:[%s1 + $0x60] sm:$0xff]
        %v364 = vld [vmem:[%s1 + $0x68] sm:$0xff]
        %v365 = vld [vmem:[%s1 + $0x70] sm:$0xff]
        %v366 = vld [vmem:[%s1 + $0x78] sm:$0xff]
        %v367 = vld [vmem:[%s1 + $0x80] sm:$0xff]
        %v368 = vld [vmem:[%s1 + $0x88] sm:$0xff]
        %v369 = vld [vmem:[%s1 + $0x90] sm:$0xff]
        %v370 = vld [vmem:[%s1 + $0x98] sm:$0xff]
        %v371 = vld [vmem:[%s1 + $0xa0] sm:$0xff]
        %v372 = vld [vmem:[%s1 + $0xa8] sm:$0xff]
        %v373 = vld [vmem:[%s1 + $0xb0] sm:$0xff]
        %v374 = vld [vmem:[%s1 + $0xb8] sm:$0xff]
        %v375 = vld [vmem:[#allocation2] sm:$0xff]
        %v376 = vld [vmem:[#allocation2 + $0x8] sm:$0xff]
        %v377 = vld [vmem:[#allocation2 + $0x10] sm:$0xff]
        %v378 = vld [vmem:[#allocation2 + $0x18] sm:$0xff]
        %v379 = vld [vmem:[#allocation2 + $0x20] sm:$0xff]
        %v380 = vld [vmem:[#allocation2 + $0x28] sm:$0xff]
        %v381 = vld [vmem:[#allocation2 + $0x30] sm:$0xff]
        %v382 = vld [vmem:[#allocation2 + $0x38] sm:$0xff]
        %v383 = vld [vmem:[#allocation2 + $0x40] sm:$0xff]
        %v384 = vld [vmem:[#allocation2 + $0x48] sm:$0xff]
        %v385 = vld [vmem:[#allocation2 + $0x50] sm:$0xff]
        %v386 = vld [vmem:[#allocation2 + $0x58] sm:$0xff]
        %v387 = vld [vmem:[#allocation2 + $0x60] sm:$0xff]
        %v388 = vld [vmem:[#allocation2 + $0x68] sm:$0xff]
        %v389 = vld [vmem:[#allocation2 + $0x70] sm:$0xff]
        %v390 = vld [vmem:[#allocation2 + $0x78] sm:$0xff]
        %v391 = vld [vmem:[#allocation2 + $0x80] sm:$0xff]
        %v392 = vld [vmem:[#allocation2 + $0x88] sm:$0xff]
        %v393 = vld [vmem:[#allocation2 + $0x90] sm:$0xff]
        %v394 = vld [vmem:[#allocation2 + $0x98] sm:$0xff]
        %v395 = vld [vmem:[#allocation2 + $0xa0] sm:$0xff]
        %v396 = vld [vmem:[#allocation2 + $0xa8] sm:$0xff]
        %v397 = vld [vmem:[#allocation2 + $0xb0] sm:$0xff]
        %v398 = vld [vmem:[#allocation2 + $0xb8] sm:$0xff]
        %v399 = vld [vmem:[#allocation2 + $0xc0] sm:$0xff]
        %v400 = vld [vmem:[#allocation2 + $0xc8] sm:$0xff]
        %v401 = vld [vmem:[#allocation2 + $0xd0] sm:$0xff]
        %v402 = vld [vmem:[#allocation2 + $0xd8] sm:$0xff]
        %v403 = vld [vmem:[#allocation2 + $0xe0] sm:$0xff]
        %v404 = vld [vmem:[#allocation2 + $0xe8] sm:$0xff]
        %v405 = vld [vmem:[#allocation2 + $0xf0] sm:$0xff]
        %v406 = vld [vmem:[#allocation2 + $0xf8] sm:$0xff]
        %v407 = vld [vmem:[#allocation2 + $0x100] sm:$0xff]
        %v408 = vld [vmem:[#allocation2 + $0x108] sm:$0xff]
        %v409 = vld [vmem:[#allocation2 + $0x110] sm:$0xff]
        %v410 = vld [vmem:[#allocation2 + $0x118] sm:$0xff]
        %vm411 = vcmask 261120
        %v413 = vsel %vm411, %v353, 0
        %v416 = vsel %vm411, %v356, 0
        %v419 = vsel %vm411, %v359, 0
        %v422 = vsel %vm411, %v362, 0
        %v425 = vsel %vm411, %v365, 0
        %v428 = vsel %vm411, %v368, 0
        %v431 = vsel %vm411, %v371, 0
        %v434 = vsel %vm411, %v374, 0
        %436 = vmatprep.subr.mxu0 0.0
        %437 = vmatpush1.msra.mxu0 %v375
        %438 = vmatprep.subr.mxu0 0.0
        %439 = vmatpush1.msra.mxu0 %v376
        %440 = vmatprep.subr.mxu0 0.0
        %441 = vmatpush1.msra.mxu0 %v377
        %442 = vmatprep.subr.mxu0 0.0
        %443 = vmatpush1.msra.mxu0 %v378
        %444 = vmatprep.subr.mxu0 0.0
        %445 = vmatpush1.msra.mxu0 %v379
        %446 = vmatprep.subr.mxu0 0.0
        %447 = vmatpush1.msra.mxu0 %v380
        %448 = vmatprep.subr.mxu0 0.0
        %449 = vmatpush1.msra.mxu0 %v381
        %450 = vmatprep.subr.mxu0 0.0
        %451 = vmatpush1.msra.mxu0 %v382
        %452 = vmatprep.subr.mxu0 0.0
        %453 = vmatpush1.msra.mxu0 %v383
        %454 = vmatprep.subr.mxu0 0.0
        %455 = vmatpush1.msra.mxu0 %v384
        %456 = vmatprep.subr.mxu0 0.0
        %457 = vmatpush1.msra.mxu0 %v385
        %458 = vmatprep.subr.mxu0 0.0
        %459 = vmatpush1.msra.mxu0 %v386
        %460 = vmatprep.subr.mxu0 0.0
        %461 = vmatpush1.msra.mxu0 %v387
        %462 = vmatprep.subr.mxu0 0.0
        %463 = vmatpush1.msra.mxu0 %v388
        %464 = vmatprep.subr.mxu0 0.0
        %465 = vmatpush1.msra.mxu0 %v389
        %466 = vmatprep.subr.mxu0 0.0
        %467 = vmatpush1.msra.mxu0 %v390
        %468 = vmatprep.subr.mxu0 0.0
        %469 = vmatpush1.msra.mxu0 %v391
        %470 = vmatprep.subr.mxu0 0.0
        %471 = vmatpush1.msra.mxu0 %v392
        %472 = vmatprep.subr.mxu0 0.0
        %473 = vmatpush1.msra.mxu0 %v393
        %474 = vmatprep.subr.mxu0 0.0
        %475 = vmatpush1.msra.mxu0 %v394
        %476 = vmatprep.subr.mxu0 0.0
        %477 = vmatpush1.msra.mxu0 %v395
        %478 = vmatprep.subr.mxu0 0.0
        %479 = vmatpush1.msra.mxu0 %v396
        %480 = vmatprep.subr.mxu0 0.0
        %481 = vmatpush1.msra.mxu0 %v397
        %482 = vmatprep.subr.mxu0 0.0
        %483 = vmatpush1.msra.mxu0 %v398
        %484 = vmatprep.subr.mxu0 0.0
        %485 = vmatpush1.msra.mxu0 %v399
        %486 = vmatprep.subr.mxu0 0.0
        %487 = vmatpush1.msra.mxu0 %v400
        %488 = vmatprep.subr.mxu0 0.0
        %489 = vmatpush1.msra.mxu0 %v401
        %490 = vmatprep.subr.mxu0 0.0
        %491 = vmatpush1.msra.mxu0 %v402
        %492 = vmatprep.subr.mxu0 0.0
        %493 = vmatpush1.msra.mxu0 %v403
        %494 = vmatprep.subr.mxu0 0.0
        %495 = vmatpush1.msra.mxu0 %v404
        %496 = vmatprep.subr.mxu0 0.0
        %497 = vmatpush1.msra.mxu0 %v405
        %498 = vmatprep.subr.mxu0 0.0
        %499 = vmatpush1.msra.mxu0 %v406
        %500 = vmatprep.mubr.f32.mxu0 %v352
        %501 = vmatmul.mubr.f32.gmra.mrb[0].mxu0 %v351
        %v502 = vpop.f32.mrb[0].mxu0
        %v503 = vadd.f32 0.0, %v502
        %v504 = vpop.f32.mrb[0].mxu0
        %505 = vmatprep.mubr.f32.mxu0 %v355
        %506 = vmatmul.mubr.f32.gmra.mrb[0].mxu0 %v354
        %v507 = vpop.f32.mrb[0].mxu0
        %v508 = vadd.f32 0.0, %v507
        %v509 = vpop.f32.mrb[0].mxu0
        %510 = vmatprep.mubr.f32.mxu0 %v358
        %511 = vmatmul.mubr.f32.gmra.mrb[0].mxu0 %v357
        %v512 = vpop.f32.mrb[0].mxu0
        %v513 = vadd.f32 0.0, %v512
        %v514 = vpop.f32.mrb[0].mxu0
        %515 = vmatprep.mubr.f32.mxu0 %v361
        %516 = vmatmul.mubr.f32.gmra.mrb[0].mxu0 %v360
        %v517 = vpop.f32.mrb[0].mxu0
        %v518 = vadd.f32 0.0, %v517
        %v519 = vpop.f32.mrb[0].mxu0
        %520 = vmatprep.mubr.f32.mxu0 %v364
        %521 = vmatmul.mubr.f32.gmra.mrb[0].mxu0 %v363
        %v522 = vpop.f32.mrb[0].mxu0
        %v523 = vadd.f32 0.0, %v522
        %v524 = vpop.f32.mrb[0].mxu0
        %525 = vmatprep.mubr.f32.mxu0 %v367
        %526 = vmatmul.mubr.f32.gmra.mrb[0].mxu0 %v366
        %v527 = vpop.f32.mrb[0].mxu0
        %v528 = vadd.f32 0.0, %v527
        %v529 = vpop.f32.mrb[0].mxu0
        %530 = vmatprep.mubr.f32.mxu0 %v370
        %531 = vmatmul.mubr.f32.gmra.mrb[0].mxu0 %v369
        %v532 = vpop.f32.mrb[0].mxu0
        %v533 = vadd.f32 0.0, %v532
        %v534 = vpop.f32.mrb[0].mxu0
        %535 = vmatprep.mubr.f32.mxu0 %v373
        %536 = vmatmul.mubr.f32.gmra.mrb[0].mxu0 %v372
        %v537 = vpop.f32.mrb[0].mxu0
        %v538 = vadd.f32 0.0, %v537
        %v539 = vpop.f32.mrb[0].mxu0
        %540 = vdwg.mxu0
        %541 = vmatprep.subr.mxu0 0.0
        %542 = vmatpush1.msra.mxu0 %v407
        %543 = vmatprep.subr.mxu0 0.0
        %544 = vmatpush1.msra.mxu0 %v408
        %545 = vmatprep.subr.mxu0 0.0
        %546 = vmatpush1.msra.mxu0 %v409
        %547 = vmatprep.subr.mxu0 0.0
        %548 = vmatpush1.msra.mxu0 %v410
        %549 = vmatprep.subr.mxu0 0.0
        %550 = vmatpush1.msra.mxu0 0.0
        %551 = vmatprep.subr.mxu0 0.0
        %552 = vmatpush1.msra.mxu0 0.0
        %553 = vmatprep.subr.mxu0 0.0
        %554 = vmatpush1.msra.mxu0 0.0
        %555 = vmatprep.subr.mxu0 0.0
        %556 = vmatpush1.msra.mxu0 0.0
        %557 = vmatprep.subr.mxu0 0.0
        %558 = vmatpush1.msra.mxu0 0.0
        %559 = vmatprep.subr.mxu0 0.0
        %560 = vmatpush1.msra.mxu0 0.0
        %561 = vmatprep.subr.mxu0 0.0
        %562 = vmatpush1.msra.mxu0 0.0
        %563 = vmatprep.subr.mxu0 0.0
        %564 = vmatpush1.msra.mxu0 0.0
        %565 = vmatprep.subr.mxu0 0.0
        %566 = vmatpush1.msra.mxu0 0.0
        %567 = vmatprep.subr.mxu0 0.0
        %568 = vmatpush1.msra.mxu0 0.0
        %569 = vmatprep.subr.mxu0 0.0
        %570 = vmatpush1.msra.mxu0 0.0
        %571 = vmatprep.subr.mxu0 0.0
        %572 = vmatpush1.msra.mxu0 0.0
        %573 = vmatprep.subr.mxu0 0.0
        %574 = vmatpush1.msra.mxu0 0.0
        %575 = vmatprep.subr.mxu0 0.0
        %576 = vmatpush1.msra.mxu0 0.0
        %577 = vmatprep.subr.mxu0 0.0
        %578 = vmatpush1.msra.mxu0 0.0
        %579 = vmatprep.subr.mxu0 0.0
        %580 = vmatpush1.msra.mxu0 0.0
        %581 = vmatprep.subr.mxu0 0.0
        %582 = vmatpush1.msra.mxu0 0.0
        %583 = vmatprep.subr.mxu0 0.0
        %584 = vmatpush1.msra.mxu0 0.0
        %585 = vmatprep.subr.mxu0 0.0
        %586 = vmatpush1.msra.mxu0 0.0
        %587 = vmatprep.subr.mxu0 0.0
        %588 = vmatpush1.msra.mxu0 0.0
        %589 = vmatprep.subr.mxu0 0.0
        %590 = vmatpush1.msra.mxu0 0.0
        %591 = vmatprep.subr.mxu0 0.0
        %592 = vmatpush1.msra.mxu0 0.0
        %593 = vmatprep.subr.mxu0 0.0
        %594 = vmatpush1.msra.mxu0 0.0
        %595 = vmatprep.subr.mxu0 0.0
        %596 = vmatpush1.msra.mxu0 0.0
        %597 = vmatprep.subr.mxu0 0.0
        %598 = vmatpush1.msra.mxu0 0.0
        %599 = vmatprep.subr.mxu0 0.0
        %600 = vmatpush1.msra.mxu0 0.0
        %601 = vmatprep.subr.mxu0 0.0
        %602 = vmatpush1.msra.mxu0 0.0
        %603 = vmatprep.subr.mxu0 0.0
        %604 = vmatpush1.msra.mxu0 0.0
        %605 = vmatprep.mubr.f32.mxu0 0.0
        %606 = vmatmul.mubr.f32.gmra.mrb[0].mxu0 %v413
        %v607 = vpop.f32.mrb[0].mxu0
        %v608 = vadd.f32 %v503, %v607
        %v609 = vpop.f32.mrb[0].mxu0
        %610 = vmatprep.mubr.f32.mxu0 0.0
        %611 = vmatmul.mubr.f32.gmra.mrb[0].mxu0 %v416
        %v612 = vpop.f32.mrb[0].mxu0
        %v613 = vadd.f32 %v508, %v612
        %v614 = vpop.f32.mrb[0].mxu0
        %615 = vmatprep.mubr.f32.mxu0 0.0
        %616 = vmatmul.mubr.f32.gmra.mrb[0].mxu0 %v419
        %v617 = vpop.f32.mrb[0].mxu0
        %v618 = vadd.f32 %v513, %v617
        %v619 = vpop.f32.mrb[0].mxu0
        %620 = vmatprep.mubr.f32.mxu0 0.0
        %621 = vmatmul.mubr.f32.gmra.mrb[0].mxu0 %v422
        %v622 = vpop.f32.mrb[0].mxu0
        %v623 = vadd.f32 %v518, %v622
        %v624 = vpop.f32.mrb[0].mxu0
        %625 = vmatprep.mubr.f32.mxu0 0.0
        %626 = vmatmul.mubr.f32.gmra.mrb[0].mxu0 %v425
        %v627 = vpop.f32.mrb[0].mxu0
        %v628 = vadd.f32 %v523, %v627
        %v629 = vpop.f32.mrb[0].mxu0
        %630 = vmatprep.mubr.f32.mxu0 0.0
        %631 = vmatmul.mubr.f32.gmra.mrb[0].mxu0 %v428
        %v632 = vpop.f32.mrb[0].mxu0
        %v633 = vadd.f32 %v528, %v632
        %v634 = vpop.f32.mrb[0].mxu0
        %635 = vmatprep.mubr.f32.mxu0 0.0
        %636 = vmatmul.mubr.f32.gmra.mrb[0].mxu0 %v431
        %v637 = vpop.f32.mrb[0].mxu0
        %v638 = vadd.f32 %v533, %v637
        %v639 = vpop.f32.mrb[0].mxu0
        %640 = vmatprep.mubr.f32.mxu0 0.0
        %641 = vmatmul.mubr.f32.gmra.mrb[0].mxu0 %v434
        %v642 = vpop.f32.mrb[0].mxu0
        %v643 = vadd.f32 %v538, %v642
        %v644 = vpop.f32.mrb[0].mxu0
        %645 = vdwg.mxu0
        %v646 = vmax.f32 %v608, %v618
        %v647 = vmax.f32 %v613, %v623
        %v648 = vmax.f32 %v628, %v638
        %v649 = vmax.f32 %v633, %v643
        %v650 = vmax.f32 %v646, %v648
        %v651 = vmax.f32 %v647, %v649
        %v652 = vld [vmem:[%s2] sm:$0xff]
        %v653 = vld [vmem:[%s2 + $0x8] sm:$0xff]
        %655 = vset.pattern.permute.xlu0 0
        %656 = vperm.xlu0 %655, %v652
        %v657 = vpop.permute.xlu0 %656
        %660 = vset.pattern.permute.xlu0 0
        %661 = vperm.xlu0 %660, %v653
        %v662 = vpop.permute.xlu0 %661
        %v664 = vadd.f32 %v650, %v657
        %v665 = vadd.f32 %v651, %v662
        %v666 = vmax.f32 %v664, 0.0
        %v667 = vmax.f32 %v665, 0.0
        %668 = vst [vmem:[%s210] sm:$0xff] %v666
        %669 = vst [vmem:[%s210 + $0x8] sm:$0xff] %v667
        %s670 = sand.u32 %s90, 1
        %s671 = sand.u32 %s90, 1
        %s672 = smul.addr %s671, 16
        %s673 = scalar_lea.vmem [#allocation4], %s672
        // Predicated region
        $region71: #{net_forward.4} parent=65 // pred_check
          %p674 = pneg %p100
        $region72: #{net_forward.4} parent=65 // pred_check_branch
          %676 = sbr.rel (%p674) target = $region74
        $region73: #{net_forward.4} parent=65 // pred_region
          %s677 = smul.addr %s14, 8
          %s678 = scalar_lea.vmem %s3, %s677
          // Predicated region
          $region75: #{net_forward.4} parent=73 // pred_check
            _
          $region76: #{net_forward.4} parent=73 // pred_check_branch
            %680 = sbr.rel (0) target = $region78
          $region77: #{net_forward.4} parent=73 // pred_region
            // Predicated region
            $region79: #{net_forward.4} parent=77 // pred_check
              _
            $region80: #{net_forward.4} parent=77 // pred_check_branch
              %682 = sbr.rel (0) target = $region82
            $region81: #{net_forward.4} parent=77 // pred_region
              // Predicated region
              $region94: #{net_forward.4} parent=81 // pred_check
                _
              $region95: #{net_forward.4} parent=81 // pred_check_branch
                %699 = sbr.rel (0) target = $region97
              $region96: #{net_forward.4} parent=81 // pred_region
                loop: start=0, step=1, limit=1
                $region98: #{net_forward.4} parent=96 // loop_pre_header
                  _
                $region99: #{net_forward.4} parent=96 // loop_header
                  %s701 = sphi 0, %s705
                  %p702 = scmp.ge.s32.totalorder %s701, 1
                  %s706 = sphi %s673, %s673
                  %s707 = sphi %s678, %s678
                $region100: #{net_forward.4} parent=96 // loop_header_branch
                  %704 = sbr.rel (%p702) target = $region104
                $region101: #{net_forward.4} parent=96 // loop_body
                  %v708 = vld [vmem:[%s706] sm:$0xff]
                  %709 = vst [vmem:[%s707] sm:$0xff] %v708
                  %v710 = vld [vmem:[%s706 + $0x8] sm:$0xff]
                  %711 = vst [vmem:[%s707 + $0x10] sm:$0xff] %v710
                $region102: #{net_forward.4} parent=96 // loop_footer
                  %s705 = sadd.s32 1, %s701
                $region103: #{net_forward.4} parent=96 // loop_footer_branch
                  %700 = sbr.rel target = $region99
                $region104: #{net_forward.4} parent=96 // loop_exit
                  _
              $region97: #{net_forward.4} parent=81 // pred_fallthru
                _
              // Predicated region
              $region105: #{net_forward.4} parent=81 // pred_check
                _
              $region106: #{net_forward.4} parent=81 // pred_check_branch
                %713 = sbr.rel target = $region108
              $region107: #{net_forward.4} parent=81 // pred_region
                _
              $region108: #{net_forward.4} parent=81 // pred_fallthru
                _
            $region82: #{net_forward.4} parent=77 // pred_fallthru
              _
            // Predicated region
            $region83: #{net_forward.4} parent=77 // pred_check
              _
            $region84: #{net_forward.4} parent=77 // pred_check_branch
              %684 = sbr.rel target = $region86
            $region85: #{net_forward.4} parent=77 // pred_region
              loop: start=0, step=1, limit=1
              $region87: #{net_forward.4} parent=85 // loop_pre_header
                _
              $region88: #{net_forward.4} parent=85 // loop_header
                %s687 = sphi 0, %s691
                %p688 = scmp.ge.s32.totalorder %s687, 1
                %s692 = sphi %s673, %s673
                %s693 = sphi %s678, %s678
              $region89: #{net_forward.4} parent=85 // loop_header_branch
                %690 = sbr.rel (%p688) target = $region93
              $region90: #{net_forward.4} parent=85 // loop_body
                %v694 = vld [vmem:[%s692] sm:$0xff]
                %695 = vst [vmem:[%s693] sm:$0xff] %v694
                %v696 = vld [vmem:[%s692 + $0x8] sm:$0xff]
                %697 = vst [vmem:[%s693 + $0x10] sm:$0xff] %v696
              $region91: #{net_forward.4} parent=85 // loop_footer
                %s691 = sadd.s32 1, %s687
              $region92: #{net_forward.4} parent=85 // loop_footer_branch
                %686 = sbr.rel target = $region88
              $region93: #{net_forward.4} parent=85 // loop_exit
                _
            $region86: #{net_forward.4} parent=77 // pred_fallthru
              _
          $region78: #{net_forward.4} parent=73 // pred_fallthru
            _
          %714 = vnop
        $region74: #{net_forward.4} parent=65 // pred_fallthru
          _
      $region66: #{net_forward.4} parent=5 // pred_fallthru
        _
      %p715 = scmp.le.s32.totalorder 2, %s9
      // Predicated region
      $region109: #{net_forward.4} parent=5 // pred_check
        %p716 = pneg %p715
      $region110: #{net_forward.4} parent=5 // pred_check_branch
        %718 = sbr.rel (%p716) target = $region112
      $region111: #{net_forward.4} parent=5 // pred_region
        %s719 = ssub.s32 %s9, 2
        // Predicated region
        $region113: #{net_forward.4} parent=111 // pred_check
          %p720 = pneg %p106
        $region114: #{net_forward.4} parent=111 // pred_check_branch
          %722 = sbr.rel (%p720) target = $region116
        $region115: #{net_forward.4} parent=111 // pred_region
          %s723 = sand.u32 %s91, 1
          %s724 = sand.u32 %s91, 1
          %s725 = smul.addr %s724, 16
          %s726 = scalar_lea.vmem [#allocation4], %s725
        $region116: #{net_forward.4} parent=111 // pred_fallthru
          _
      $region112: #{net_forward.4} parent=5 // pred_fallthru
        _
    $region6: #{net_forward.4} parent=1 // loop_footer
      %s13 = sadd.s32 1, %s9
    $region7: #{net_forward.4} parent=1 // loop_footer_branch
      %8 = sbr.rel target = $region3
    $region8: #{net_forward.4} parent=1 // loop_exit
      _

// kernel: net_forward.5
$region0: #{net_forward.5}
  #allocation0 [shape = 'u32[]', space=smem, size = 0x4, offset = 0x4, fixed_abs, tag = 'smem constant byte address 0x4 - core index']
  #allocation1 [shape = 'u32[144,128]{1,0:T(1,128)}', space=vmem, size = 0x12000, scoped, tag = 'internal scratch']
  %s0 = inlined_call_operand.vmem [shape: f32[2,512], index: 0, kind: input, shape index: {}]
  %s1 = inlined_call_operand.vmem [shape: f32[512,128], index: 1, kind: input, shape index: {}]
  %s2 = inlined_call_operand.vmem [shape: f32[1,128], index: 2, kind: input, shape index: {}]
  %s3 = inlined_call_operand.vmem [shape: f32[128,128], index: 3, kind: input, shape index: {}]
  %s4 = inlined_call_operand.vmem [shape: f32[1,128], index: 4, kind: input, shape index: {}]
  %s5 = inlined_call_operand.vmem [shape: f32[128,128], index: 5, kind: input, shape index: {}]
  %s6 = inlined_call_operand.vmem [shape: f32[1,128], index: 6, kind: input, shape index: {}]
  %s7 = inlined_call_operand.hbm [shape: f32[2,128], index: 7, kind: output, shape index: {}]
  %s8 = sld [smem:[#allocation0]]
  $region38: #{net_forward.5} parent=0
    _
  %s10 = ssub.s32 1, %s8
  %s11 = scalar_select 0, %s10, %s8
  $region1: #{net_forward.5} parent=0
    #allocation2 [shape = 'u8[1024]{0}', space=vmem, size = 0x400, scoped, tag = 'output window, operand 0, single buffered']
    #allocation3 [shape = 's32[1]{0}', space=sflag, size = 0x4, scoped, tag = 'scoped memory for net_forward.5']
    %12 = vsyncpa [#allocation3], 0
    // Predicated region
    $region2: #{net_forward.5} parent=1 // pred_check
      _
    $region3: #{net_forward.5} parent=1 // pred_check_branch
      %14 = sbr.rel (0) target = $region5
    $region4: #{net_forward.5} parent=1 // pred_region
      _
    $region5: #{net_forward.5} parent=1 // pred_fallthru
      _
    // Predicated region
    $region6: #{net_forward.5} parent=1 // pred_check
      _
    $region7: #{net_forward.5} parent=1 // pred_check_branch
      %16 = sbr.rel (0) target = $region9
    $region8: #{net_forward.5} parent=1 // pred_region
      _
    $region9: #{net_forward.5} parent=1 // pred_fallthru
      _
    // Predicated region
    $region10: #{net_forward.5} parent=1 // pred_check
      _
    $region11: #{net_forward.5} parent=1 // pred_check_branch
      %18 = sbr.rel (0) target = $region13
    $region12: #{net_forward.5} parent=1 // pred_region
      _
    $region13: #{net_forward.5} parent=1 // pred_fallthru
      _
    // Predicated region
    $region14: #{net_forward.5} parent=1 // pred_check
      _
    $region15: #{net_forward.5} parent=1 // pred_check_branch
      %20 = sbr.rel (0) target = $region17
    $region16: #{net_forward.5} parent=1 // pred_region
      _
    $region17: #{net_forward.5} parent=1 // pred_fallthru
      _
    // Predicated region
    $region18: #{net_forward.5} parent=1 // pred_check
      _
    $region19: #{net_forward.5} parent=1 // pred_check_branch
      %22 = sbr.rel (0) target = $region21
    $region20: #{net_forward.5} parent=1 // pred_region
      _
    $region21: #{net_forward.5} parent=1 // pred_fallthru
      _
    // Predicated region
    $region22: #{net_forward.5} parent=1 // pred_check
      _
    $region23: #{net_forward.5} parent=1 // pred_check_branch
      %24 = sbr.rel (0) target = $region25
    $region24: #{net_forward.5} parent=1 // pred_region
      _
    $region25: #{net_forward.5} parent=1 // pred_fallthru
      _
    // Predicated region
    $region26: #{net_forward.5} parent=1 // pred_check
      _
    $region27: #{net_forward.5} parent=1 // pred_check_branch
      %26 = sbr.rel (0) target = $region29
    $region28: #{net_forward.5} parent=1 // pred_region
      _
    $region29: #{net_forward.5} parent=1 // pred_fallthru
      _
    %v27 = vld [vmem:[%s0] sm:$0xff]
    %v28 = vld [vmem:[%s1] sm:$0xff]
    %v29 = vld [vmem:[%s1 + $0x8] sm:$0xff]
    %v30 = vld [vmem:[%s1 + $0x10] sm:$0xff]
    %v31 = vld [vmem:[%s1 + $0x18] sm:$0xff]
    %v32 = vld [vmem:[%s1 + $0x20] sm:$0xff]
    %v33 = vld [vmem:[%s1 + $0x28] sm:$0xff]
    %v34 = vld [vmem:[%s1 + $0x30] sm:$0xff]
    %v35 = vld [vmem:[%s1 + $0x38] sm:$0xff]
    %v36 = vld [vmem:[%s1 + $0x40] sm:$0xff]
    %v37 = vld [vmem:[%s1 + $0x48] sm:$0xff]
    %v38 = vld [vmem:[%s1 + $0x50] sm:$0xff]
    %v39 = vld [vmem:[%s1 + $0x58] sm:$0xff]
    %v40 = vld [vmem:[%s1 + $0x60] sm:$0xff]
    %v41 = vld [vmem:[%s1 + $0x68] sm:$0xff]
    %v42 = vld [vmem:[%s1 + $0x70] sm:$0xff]
    %v43 = vld [vmem:[%s1 + $0x78] sm:$0xff]
    %v44 = vld [vmem:[%s1 + $0x80] sm:$0xff]
    %v45 = vld [vmem:[%s1 + $0x88] sm:$0xff]
    %v46 = vld [vmem:[%s1 + $0x90] sm:$0xff]
    %v47 = vld [vmem:[%s1 + $0x98] sm:$0xff]
    %v48 = vld [vmem:[%s1 + $0xa0] sm:$0xff]
    %v49 = vld [vmem:[%s1 + $0xa8] sm:$0xff]
    %v50 = vld [vmem:[%s1 + $0xb0] sm:$0xff]
    %v51 = vld [vmem:[%s1 + $0xb8] sm:$0xff]
    %v52 = vld [vmem:[%s1 + $0xc0] sm:$0xff]
    %v53 = vld [vmem:[%s1 + $0xc8] sm:$0xff]
    %v54 = vld [vmem:[%s1 + $0xd0] sm:$0xff]
    %v55 = vld [vmem:[%s1 + $0xd8] sm:$0xff]
    %v56 = vld [vmem:[%s1 + $0xe0] sm:$0xff]
    %v57 = vld [vmem:[%s1 + $0xe8] sm:$0xff]
    %v58 = vld [vmem:[%s1 + $0xf0] sm:$0xff]
    %v59 = vld [vmem:[%s1 + $0xf8] sm:$0xff]
    %v60 = vld [vmem:[%s1 + $0x100] sm:$0xff]
    %v61 = vld [vmem:[%s1 + $0x108] sm:$0xff]
    %v62 = vld [vmem:[%s1 + $0x110] sm:$0xff]
    %v63 = vld [vmem:[%s1 + $0x118] sm:$0xff]
    %v64 = vld [vmem:[%s1 + $0x120] sm:$0xff]
    %v65 = vld [vmem:[%s1 + $0x128] sm:$0xff]
    %v66 = vld [vmem:[%s1 + $0x130] sm:$0xff]
    %v67 = vld [vmem:[%s1 + $0x138] sm:$0xff]
    %v68 = vld [vmem:[%s1 + $0x140] sm:$0xff]
    %v69 = vld [vmem:[%s1 + $0x148] sm:$0xff]
    %v70 = vld [vmem:[%s1 + $0x150] sm:$0xff]
    %v71 = vld [vmem:[%s1 + $0x158] sm:$0xff]
    %v72 = vld [vmem:[%s1 + $0x160] sm:$0xff]
    %v73 = vld [vmem:[%s1 + $0x168] sm:$0xff]
    %v74 = vld [vmem:[%s1 + $0x170] sm:$0xff]
    %v75 = vld [vmem:[%s1 + $0x178] sm:$0xff]
    %v76 = vld [vmem:[%s1 + $0x180] sm:$0xff]
    %v77 = vld [vmem:[%s1 + $0x188] sm:$0xff]
    %v78 = vld [vmem:[%s1 + $0x190] sm:$0xff]
    %v79 = vld [vmem:[%s1 + $0x198] sm:$0xff]
    %v80 = vld [vmem:[%s1 + $0x1a0] sm:$0xff]
    %v81 = vld [vmem:[%s1 + $0x1a8] sm:$0xff]
    %v82 = vld [vmem:[%s1 + $0x1b0] sm:$0xff]
    %v83 = vld [vmem:[%s1 + $0x1b8] sm:$0xff]
    %v84 = vld [vmem:[%s1 + $0x1c0] sm:$0xff]
    %v85 = vld [vmem:[%s1 + $0x1c8] sm:$0xff]
    %v86 = vld [vmem:[%s1 + $0x1d0] sm:$0xff]
    %v87 = vld [vmem:[%s1 + $0x1d8] sm:$0xff]
    %v88 = vld [vmem:[%s1 + $0x1e0] sm:$0xff]
    %v89 = vld [vmem:[%s1 + $0x1e8] sm:$0xff]
    %v90 = vld [vmem:[%s1 + $0x1f0] sm:$0xff]
    %v91 = vld [vmem:[%s1 + $0x1f8] sm:$0xff]
    %v92 = vld [vmem:[%s2] sm:$0x1]
    %v94 = vlaneseq
    %v95 = vshrl.u32 %v94, 7
    %v96 = vsub.s32 0, %v95
    %v97 = vrot.slane %v92, %v96
    %v100 = vcombine.high %v27, %v27
    %v102 = vunpack.c.l.s4 1983009808
    %v103 = vunpack.c.0.s8 %v102
    %v104 = vlaneseq
    %v105 = vshrl.u32 %v104, 7
    %v106 = vsub.s32 %v103, %v105
    %v107 = vrot.slane %v27, %v106
    %v109 = vunpack.c.l.s4 1983009808
    %v110 = vunpack.c.0.s8 %v109
    %v111 = vlaneseq
    %v112 = vshrl.u32 %v111, 7
    %v113 = vsub.s32 %v110, %v112
    %v114 = vrot.slane %v100, %v113
    %v115 = vcombine.high %v107, %v107
    %v116 = vcombine.high %v114, %v114
    %121 = vmatprep.subr.mxu0 0.0
    %122 = vmatpush1.msra.mxu0 %v28
    %123 = vmatprep.subr.mxu0 0.0
    %124 = vmatpush1.msra.mxu0 %v29
    %125 = vmatprep.subr.mxu0 0.0
    %126 = vmatpush1.msra.mxu0 %v30
    %127 = vmatprep.subr.mxu0 0.0
    %128 = vmatpush1.msra.mxu0 %v31
    %129 = vmatprep.subr.mxu0 0.0
    %130 = vmatpush1.msra.mxu0 %v32
    %131 = vmatprep.subr.mxu0 0.0
    %132 = vmatpush1.msra.mxu0 %v33
    %133 = vmatprep.subr.mxu0 0.0
    %134 = vmatpush1.msra.mxu0 %v34
    %135 = vmatprep.subr.mxu0 0.0
    %136 = vmatpush1.msra.mxu0 %v35
    %137 = vmatprep.subr.mxu0 0.0
    %138 = vmatpush1.msra.mxu0 %v36
    %139 = vmatprep.subr.mxu0 0.0
    %140 = vmatpush1.msra.mxu0 %v37
    %141 = vmatprep.subr.mxu0 0.0
    %142 = vmatpush1.msra.mxu0 %v38
    %143 = vmatprep.subr.mxu0 0.0
    %144 = vmatpush1.msra.mxu0 %v39
    %145 = vmatprep.subr.mxu0 0.0
    %146 = vmatpush1.msra.mxu0 %v40
    %147 = vmatprep.subr.mxu0 0.0
    %148 = vmatpush1.msra.mxu0 %v41
    %149 = vmatprep.subr.mxu0 0.0
    %150 = vmatpush1.msra.mxu0 %v42
    %151 = vmatprep.subr.mxu0 0.0
    %152 = vmatpush1.msra.mxu0 %v43
    %153 = vmatprep.subr.mxu0 0.0
    %154 = vmatpush1.msra.mxu0 %v44
    %155 = vmatprep.subr.mxu0 0.0
    %156 = vmatpush1.msra.mxu0 %v45
    %157 = vmatprep.subr.mxu0 0.0
    %158 = vmatpush1.msra.mxu0 %v46
    %159 = vmatprep.subr.mxu0 0.0
    %160 = vmatpush1.msra.mxu0 %v47
    %161 = vmatprep.subr.mxu0 0.0
    %162 = vmatpush1.msra.mxu0 %v48
    %163 = vmatprep.subr.mxu0 0.0
    %164 = vmatpush1.msra.mxu0 %v49
    %165 = vmatprep.subr.mxu0 0.0
    %166 = vmatpush1.msra.mxu0 %v50
    %167 = vmatprep.subr.mxu0 0.0
    %168 = vmatpush1.msra.mxu0 %v51
    %169 = vmatprep.subr.mxu0 0.0
    %170 = vmatpush1.msra.mxu0 %v52
    %171 = vmatprep.subr.mxu0 0.0
    %172 = vmatpush1.msra.mxu0 %v53
    %173 = vmatprep.subr.mxu0 0.0
    %174 = vmatpush1.msra.mxu0 %v54
    %175 = vmatprep.subr.mxu0 0.0
    %176 = vmatpush1.msra.mxu0 %v55
    %177 = vmatprep.subr.mxu0 0.0
    %178 = vmatpush1.msra.mxu0 %v56
    %179 = vmatprep.subr.mxu0 0.0
    %180 = vmatpush1.msra.mxu0 %v57
    %181 = vmatprep.subr.mxu0 0.0
    %182 = vmatpush1.msra.mxu0 %v58
    %183 = vmatprep.subr.mxu0 0.0
    %184 = vmatpush1.msra.mxu0 %v59
    %185 = vmatprep.mubr.f32.mxu0 %v115
    %186 = vmatmul.mubr.f32.gmra.mrb[0].mxu0 %v107
    %v187 = vpop.f32.mrb[0].mxu0
    %v188 = vadd.f32 %v97, %v187
    %v189 = vpop.f32.mrb[0].mxu0
    %190 = vdwg.mxu0
    %191 = vmatprep.subr.mxu0 0.0
    %192 = vmatpush1.msra.mxu0 %v60
    %193 = vmatprep.subr.mxu0 0.0
    %194 = vmatpush1.msra.mxu0 %v61
    %195 = vmatprep.subr.mxu0 0.0
    %196 = vmatpush1.msra.mxu0 %v62
    %197 = vmatprep.subr.mxu0 0.0
    %198 = vmatpush1.msra.mxu0 %v63
    %199 = vmatprep.subr.mxu0 0.0
    %200 = vmatpush1.msra.mxu0 %v64
    %201 = vmatprep.subr.mxu0 0.0
    %202 = vmatpush1.msra.mxu0 %v65
    %203 = vmatprep.subr.mxu0 0.0
    %204 = vmatpush1.msra.mxu0 %v66
    %205 = vmatprep.subr.mxu0 0.0
    %206 = vmatpush1.msra.mxu0 %v67
    %207 = vmatprep.subr.mxu0 0.0
    %208 = vmatpush1.msra.mxu0 %v68
    %209 = vmatprep.subr.mxu0 0.0
    %210 = vmatpush1.msra.mxu0 %v69
    %211 = vmatprep.subr.mxu0 0.0
    %212 = vmatpush1.msra.mxu0 %v70
    %213 = vmatprep.subr.mxu0 0.0
    %214 = vmatpush1.msra.mxu0 %v71
    %215 = vmatprep.subr.mxu0 0.0
    %216 = vmatpush1.msra.mxu0 %v72
    %217 = vmatprep.subr.mxu0 0.0
    %218 = vmatpush1.msra.mxu0 %v73
    %219 = vmatprep.subr.mxu0 0.0
    %220 = vmatpush1.msra.mxu0 %v74
    %221 = vmatprep.subr.mxu0 0.0
    %222 = vmatpush1.msra.mxu0 %v75
    %223 = vmatprep.subr.mxu0 0.0
    %224 = vmatpush1.msra.mxu0 %v76
    %225 = vmatprep.subr.mxu0 0.0
    %226 = vmatpush1.msra.mxu0 %v77
    %227 = vmatprep.subr.mxu0 0.0
    %228 = vmatpush1.msra.mxu0 %v78
    %229 = vmatprep.subr.mxu0 0.0
    %230 = vmatpush1.msra.mxu0 %v79
    %231 = vmatprep.subr.mxu0 0.0
    %232 = vmatpush1.msra.mxu0 %v80
    %233 = vmatprep.subr.mxu0 0.0
    %234 = vmatpush1.msra.mxu0 %v81
    %235 = vmatprep.subr.mxu0 0.0
    %236 = vmatpush1.msra.mxu0 %v82
    %237 = vmatprep.subr.mxu0 0.0
    %238 = vmatpush1.msra.mxu0 %v83
    %239 = vmatprep.subr.mxu0 0.0
    %240 = vmatpush1.msra.mxu0 %v84
    %241 = vmatprep.subr.mxu0 0.0
    %242 = vmatpush1.msra.mxu0 %v85
    %243 = vmatprep.subr.mxu0 0.0
    %244 = vmatpush1.msra.mxu0 %v86
    %245 = vmatprep.subr.mxu0 0.0
    %246 = vmatpush1.msra.mxu0 %v87
    %247 = vmatprep.subr.mxu0 0.0
    %248 = vmatpush1.msra.mxu0 %v88
    %249 = vmatprep.subr.mxu0 0.0
    %250 = vmatpush1.msra.mxu0 %v89
    %251 = vmatprep.subr.mxu0 0.0
    %252 = vmatpush1.msra.mxu0 %v90
    %253 = vmatprep.subr.mxu0 0.0
    %254 = vmatpush1.msra.mxu0 %v91
    %255 = vmatprep.mubr.f32.mxu0 %v116
    %256 = vmatmul.mubr.f32.gmra.mrb[0].mxu0 %v114
    %v257 = vpop.f32.mrb[0].mxu0
    %v258 = vadd.f32 %v188, %v257
    %v259 = vpop.f32.mrb[0].mxu0
    %260 = vdwg.mxu0
    %v261 = vmax.f32 %v258, 0.0
    %v262 = vld [vmem:[%s3] sm:$0xff]
    %v263 = vld [vmem:[%s3 + $0x8] sm:$0xff]
    %v264 = vld [vmem:[%s3 + $0x10] sm:$0xff]
    %v265 = vld [vmem:[%s3 + $0x18] sm:$0xff]
    %v266 = vld [vmem:[%s3 + $0x20] sm:$0xff]
    %v267 = vld [vmem:[%s3 + $0x28] sm:$0xff]
    %v268 = vld [vmem:[%s3 + $0x30] sm:$0xff]
    %v269 = vld [vmem:[%s3 + $0x38] sm:$0xff]
    %v270 = vld [vmem:[%s3 + $0x40] sm:$0xff]
    %v271 = vld [vmem:[%s3 + $0x48] sm:$0xff]
    %v272 = vld [vmem:[%s3 + $0x50] sm:$0xff]
    %v273 = vld [vmem:[%s3 + $0x58] sm:$0xff]
    %v274 = vld [vmem:[%s3 + $0x60] sm:$0xff]
    %v275 = vld [vmem:[%s3 + $0x68] sm:$0xff]
    %v276 = vld [vmem:[%s3 + $0x70] sm:$0xff]
    %v277 = vld [vmem:[%s3 + $0x78] sm:$0xff]
    %v278 = vld [vmem:[%s4] sm:$0x1]
    %v280 = vlaneseq
    %v281 = vshrl.u32 %v280, 7
    %v282 = vsub.s32 0, %v281
    %v283 = vrot.slane %v278, %v282
    %285 = vmatprep.subr.mxu0 0.0
    %286 = vmatpush1.msra.mxu0 %v262
    %287 = vmatprep.subr.mxu0 0.0
    %288 = vmatpush1.msra.mxu0 %v263
    %289 = vmatprep.subr.mxu0 0.0
    %290 = vmatpush1.msra.mxu0 %v264
    %291 = vmatprep.subr.mxu0 0.0
    %292 = vmatpush1.msra.mxu0 %v265
    %293 = vmatprep.subr.mxu0 0.0
    %294 = vmatpush1.msra.mxu0 %v266
    %295 = vmatprep.subr.mxu0 0.0
    %296 = vmatpush1.msra.mxu0 %v267
    %297 = vmatprep.subr.mxu0 0.0
    %298 = vmatpush1.msra.mxu0 %v268
    %299 = vmatprep.subr.mxu0 0.0
    %300 = vmatpush1.msra.mxu0 %v269
    %301 = vmatprep.subr.mxu0 0.0
    %302 = vmatpush1.msra.mxu0 %v270
    %303 = vmatprep.subr.mxu0 0.0
    %304 = vmatpush1.msra.mxu0 %v271
    %305 = vmatprep.subr.mxu0 0.0
    %306 = vmatpush1.msra.mxu0 %v272
    %307 = vmatprep.subr.mxu0 0.0
    %308 = vmatpush1.msra.mxu0 %v273
    %309 = vmatprep.subr.mxu0 0.0
    %310 = vmatpush1.msra.mxu0 %v274
    %311 = vmatprep.subr.mxu0 0.0
    %312 = vmatpush1.msra.mxu0 %v275
    %313 = vmatprep.subr.mxu0 0.0
    %314 = vmatpush1.msra.mxu0 %v276
    %315 = vmatprep.subr.mxu0 0.0
    %316 = vmatpush1.msra.mxu0 %v277
    %317 = vmatprep.subr.mxu0 0.0
    %318 = vmatpush1.msra.mxu0 0.0
    %319 = vmatprep.subr.mxu0 0.0
    %320 = vmatpush1.msra.mxu0 0.0
    %321 = vmatprep.subr.mxu0 0.0
    %322 = vmatpush1.msra.mxu0 0.0
    %323 = vmatprep.subr.mxu0 0.0
    %324 = vmatpush1.msra.mxu0 0.0
    %325 = vmatprep.subr.mxu0 0.0
    %326 = vmatpush1.msra.mxu0 0.0
    %327 = vmatprep.subr.mxu0 0.0
    %328 = vmatpush1.msra.mxu0 0.0
    %329 = vmatprep.subr.mxu0 0.0
    %330 = vmatpush1.msra.mxu0 0.0
    %331 = vmatprep.subr.mxu0 0.0
    %332 = vmatpush1.msra.mxu0 0.0
    %333 = vmatprep.subr.mxu0 0.0
    %334 = vmatpush1.msra.mxu0 0.0
    %335 = vmatprep.subr.mxu0 0.0
    %336 = vmatpush1.msra.mxu0 0.0
    %337 = vmatprep.subr.mxu0 0.0
    %338 = vmatpush1.msra.mxu0 0.0
    %339 = vmatprep.subr.mxu0 0.0
    %340 = vmatpush1.msra.mxu0 0.0
    %341 = vmatprep.subr.mxu0 0.0
    %342 = vmatpush1.msra.mxu0 0.0
    %343 = vmatprep.subr.mxu0 0.0
    %344 = vmatpush1.msra.mxu0 0.0
    %345 = vmatprep.subr.mxu0 0.0
    %346 = vmatpush1.msra.mxu0 0.0
    %347 = vmatprep.subr.mxu0 0.0
    %348 = vmatpush1.msra.mxu0 0.0
    %349 = vmatprep.mubr.f32.mxu0 0.0
    %350 = vmatmul.mubr.f32.gmra.mrb[0].mxu0 %v261
    %v351 = vpop.f32.mrb[0].mxu0
    %v352 = vadd.f32 %v283, %v351
    %v353 = vpop.f32.mrb[0].mxu0
    %354 = vdwg.mxu0
    %v355 = vmax.f32 %v352, 0.0
    %v356 = vld [vmem:[%s5] sm:$0xff]
    %v357 = vld [vmem:[%s5 + $0x8] sm:$0xff]
    %v358 = vld [vmem:[%s5 + $0x10] sm:$0xff]
    %v359 = vld [vmem:[%s5 + $0x18] sm:$0xff]
    %v360 = vld [vmem:[%s5 + $0x20] sm:$0xff]
    %v361 = vld [vmem:[%s5 + $0x28] sm:$0xff]
    %v362 = vld [vmem:[%s5 + $0x30] sm:$0xff]
    %v363 = vld [vmem:[%s5 + $0x38] sm:$0xff]
    %v364 = vld [vmem:[%s5 + $0x40] sm:$0xff]
    %v365 = vld [vmem:[%s5 + $0x48] sm:$0xff]
    %v366 = vld [vmem:[%s5 + $0x50] sm:$0xff]
    %v367 = vld [vmem:[%s5 + $0x58] sm:$0xff]
    %v368 = vld [vmem:[%s5 + $0x60] sm:$0xff]
    %v369 = vld [vmem:[%s5 + $0x68] sm:$0xff]
    %v370 = vld [vmem:[%s5 + $0x70] sm:$0xff]
    %v371 = vld [vmem:[%s5 + $0x78] sm:$0xff]
    %v372 = vld [vmem:[%s6] sm:$0x1]
    %v374 = vlaneseq
    %v375 = vshrl.u32 %v374, 7
    %v376 = vsub.s32 0, %v375
    %v377 = vrot.slane %v372, %v376
    %379 = vmatprep.subr.mxu0 0.0
    %380 = vmatpush1.msra.mxu0 %v356
    %381 = vmatprep.subr.mxu0 0.0
    %382 = vmatpush1.msra.mxu0 %v357
    %383 = vmatprep.subr.mxu0 0.0
    %384 = vmatpush1.msra.mxu0 %v358
    %385 = vmatprep.subr.mxu0 0.0
    %386 = vmatpush1.msra.mxu0 %v359
    %387 = vmatprep.subr.mxu0 0.0
    %388 = vmatpush1.msra.mxu0 %v360
    %389 = vmatprep.subr.mxu0 0.0
    %390 = vmatpush1.msra.mxu0 %v361
    %391 = vmatprep.subr.mxu0 0.0
    %392 = vmatpush1.msra.mxu0 %v362
    %393 = vmatprep.subr.mxu0 0.0
    %394 = vmatpush1.msra.mxu0 %v363
    %395 = vmatprep.subr.mxu0 0.0
    %396 = vmatpush1.msra.mxu0 %v364
    %397 = vmatprep.subr.mxu0 0.0
    %398 = vmatpush1.msra.mxu0 %v365
    %399 = vmatprep.subr.mxu0 0.0
    %400 = vmatpush1.msra.mxu0 %v366
    %401 = vmatprep.subr.mxu0 0.0
    %402 = vmatpush1.msra.mxu0 %v367
    %403 = vmatprep.subr.mxu0 0.0
    %404 = vmatpush1.msra.mxu0 %v368
    %405 = vmatprep.subr.mxu0 0.0
    %406 = vmatpush1.msra.mxu0 %v369
    %407 = vmatprep.subr.mxu0 0.0
    %408 = vmatpush1.msra.mxu0 %v370
    %409 = vmatprep.subr.mxu0 0.0
    %410 = vmatpush1.msra.mxu0 %v371
    %411 = vmatprep.subr.mxu0 0.0
    %412 = vmatpush1.msra.mxu0 0.0
    %413 = vmatprep.subr.mxu0 0.0
    %414 = vmatpush1.msra.mxu0 0.0
    %415 = vmatprep.subr.mxu0 0.0
    %416 = vmatpush1.msra.mxu0 0.0
    %417 = vmatprep.subr.mxu0 0.0
    %418 = vmatpush1.msra.mxu0 0.0
    %419 = vmatprep.subr.mxu0 0.0
    %420 = vmatpush1.msra.mxu0 0.0
    %421 = vmatprep.subr.mxu0 0.0
    %422 = vmatpush1.msra.mxu0 0.0
    %423 = vmatprep.subr.mxu0 0.0
    %424 = vmatpush1.msra.mxu0 0.0
    %425 = vmatprep.subr.mxu0 0.0
    %426 = vmatpush1.msra.mxu0 0.0
    %427 = vmatprep.subr.mxu0 0.0
    %428 = vmatpush1.msra.mxu0 0.0
    %429 = vmatprep.subr.mxu0 0.0
    %430 = vmatpush1.msra.mxu0 0.0
    %431 = vmatprep.subr.mxu0 0.0
    %432 = vmatpush1.msra.mxu0 0.0
    %433 = vmatprep.subr.mxu0 0.0
    %434 = vmatpush1.msra.mxu0 0.0
    %435 = vmatprep.subr.mxu0 0.0
    %436 = vmatpush1.msra.mxu0 0.0
    %437 = vmatprep.subr.mxu0 0.0
    %438 = vmatpush1.msra.mxu0 0.0
    %439 = vmatprep.subr.mxu0 0.0
    %440 = vmatpush1.msra.mxu0 0.0
    %441 = vmatprep.subr.mxu0 0.0
    %442 = vmatpush1.msra.mxu0 0.0
    %443 = vmatprep.mubr.f32.mxu0 0.0
    %444 = vmatmul.mubr.f32.gmra.mrb[0].mxu0 %v355
    %v445 = vpop.f32.mrb[0].mxu0
    %v446 = vadd.f32 %v377, %v445
    %v447 = vpop.f32.mrb[0].mxu0
    %448 = vdwg.mxu0
    %449 = vst [vmem:[#allocation2] sm:$0x3] %v446
    // Predicated region
    $region30: #{net_forward.5} parent=1 // pred_check
      _
    $region31: #{net_forward.5} parent=1 // pred_check_branch
      %451 = sbr.rel (0) target = $region33
    $region32: #{net_forward.5} parent=1 // pred_region
      %s453 = ssub.s32 32, 32
      %454 = vsyncadd [#allocation3], %s453
      %s456 = sshll.u32 [#allocation2], 4
      %s457 = int_to_ptr.vmem [resolvable:$true] %s456
      %459 = dma.vmem_to_hbm [thread:$0]  %s457, 32, %s7, [#allocation3]
    $region33: #{net_forward.5} parent=1 // pred_fallthru
      _
    // Predicated region
    $region34: #{net_forward.5} parent=1 // pred_check
      _
    $region35: #{net_forward.5} parent=1 // pred_check_branch
      %461 = sbr.rel (0) target = $region37
    $region36: #{net_forward.5} parent=1 // pred_region
      %462 = dma.done [#allocation3], 32
    $region37: #{net_forward.5} parent=1 // pred_fallthru
      _
    %463 = vsyncpa [#allocation3], 1

</llo_original>
